<compile_context>
chip_gen: v5e
topology: v5e:2x2
jax: 0.10.0
libtpu: 0.0.40
codegen_flags: <defaults>
</compile_context>

<pallas_src>
import math

import jax
import jax.numpy as jnp
from jax.experimental import pallas as pl
from jax.experimental.pallas import tpu as pltpu


# ----------------------------------------------------------------------------
# Fused Siamese-CNN forward kernel
# ----------------------------------------------------------------------------
def _dural_cnn_kernel(
    x_ref,                      # (2N, T, Cin)  both branches stacked, channels-last
    wc1_ref, bc1_ref,           # (K, Cin, C1), (1, C1)
    s1_ref, t1_ref,             # (1, C1)  BatchNorm1 scale / shift (eval mode)
    wc2_ref, bc2_ref,           # (K, C1, C2), (1, C2)
    s2_ref, t2_ref,             # (1, C2)  BatchNorm2 scale / shift
    w1_ref, b1_ref,             # (T2p, C2, L1), (1, L1)  Linear1 in flatten-free layout
    w2_ref, b2_ref,             # (L1, L2), (1, L2)
    w3_ref, b3_ref,             # (L2, 32), (1, 32)
    w4_ref, b4_ref,             # (32, 1), (1, 1)
    out_ref,                    # (N, 1)
    h1_scr,                     # VMEM (2N*T1, C1)  conv1 + ReLU output
    h2_scr,                     # VMEM (2N*T2, C2)  conv2 + ReLU output
):
    B2, T, Cin = x_ref.shape
    K, _, C1 = wc1_ref.shape
    _, _, C2 = wc2_ref.shape
    N = out_ref.shape[0]
    T1 = T - K + 1              # conv1 output length
    T1p = T1 // 2               # after MaxPool1d(2,2)
    T2 = T1p - K + 1            # conv2 output length
    T2p = T2 // 2

    x = x_ref[...]

    # ---- stage 1: Conv1d(Cin->C1, k=K) + ReLU  (conv = K shifted matmuls) ----
    acc1 = jnp.dot(x[:, 0:T1, :].reshape(B2 * T1, Cin), wc1_ref[0],
                   preferred_element_type=jnp.float32)
    for k in range(1, K):
        acc1 = acc1 + jnp.dot(x[:, k:k + T1, :].reshape(B2 * T1, Cin), wc1_ref[k],
                              preferred_element_type=jnp.float32)
    h1_scr[...] = jnp.maximum(acc1 + bc1_ref[...], 0.0)

    # ---- stage 1: MaxPool1d(2,2) via stride-2 reads, Dropout (eval: identity),
    #      BatchNorm1d (eval: y = x*scale + shift) ----
    # TODO(synk): Dropout(p=0.2) / train-mode BatchNorm batch-statistics not implemented (eval mode).
    ev = h1_scr[pl.ds(0, B2 * T1p, 2), :]
    od = h1_scr[pl.ds(1, B2 * T1p, 2), :]
    p1 = jnp.maximum(ev, od) * s1_ref[...] + t1_ref[...]          # (2N*T1p, C1)
    p1 = p1.reshape(B2, T1p, C1)

    # ---- stage 2: Conv1d(C1->C2, k=K) + ReLU ----
    acc2 = jnp.dot(p1[:, 0:T2, :].reshape(B2 * T2, C1), wc2_ref[0],
                   preferred_element_type=jnp.float32)
    for k in range(1, K):
        acc2 = acc2 + jnp.dot(p1[:, k:k + T2, :].reshape(B2 * T2, C1), wc2_ref[k],
                              preferred_element_type=jnp.float32)
    h2_scr[...] = jnp.maximum(acc2 + bc2_ref[...], 0.0)

    # ---- stage 2: MaxPool1d(2,2) + BatchNorm1d ----
    ev2 = h2_scr[pl.ds(0, B2 * T2p, 2), :]
    od2 = h2_scr[pl.ds(1, B2 * T2p, 2), :]
    feat = jnp.maximum(ev2, od2) * s2_ref[...] + t2_ref[...]      # (2N*T2p, C2)

    # ---- Siamese merge: final = |l2_feat - l_feat| (Flatten kept implicit) ----
    fa = feat[:N * T2p, :]                                        # branch `l`
    fb = feat[N * T2p:, :]                                        # branch `l2`
    d = jnp.abs(fb - fa).reshape(N, T2p, C2)

    # ---- Linear1 as sum_t d[:, t, :] @ W1[t]  (no (N, T2p*C2) reshape) ----
    h = jnp.dot(d[:, 0, :], w1_ref[0], preferred_element_type=jnp.float32)
    for t in range(1, T2p):
        h = h + jnp.dot(d[:, t, :], w1_ref[t], preferred_element_type=jnp.float32)
    h = jnp.maximum(h + b1_ref[...], 0.0)

    # ---- Linear2 / Linear3 / Linear4 ----
    h = jnp.maximum(jnp.dot(h, w2_ref[...], preferred_element_type=jnp.float32)
                    + b2_ref[...], 0.0)
    h = jnp.maximum(jnp.dot(h, w3_ref[...], preferred_element_type=jnp.float32)
                    + b3_ref[...], 0.0)
    out_ref[...] = (jnp.dot(h, w4_ref[...], preferred_element_type=jnp.float32)
                    + b4_ref[...])


# ----------------------------------------------------------------------------
# Wrapper: layout plumbing (stack branches, channels-last, weight transposes)
# ----------------------------------------------------------------------------
def timeseries_net_dural_cnn_forward(l, l2, params, eps=1e-5):
    """l, l2: (N, 26, T) float32 in PyTorch NCW layout. Returns (N, 1)."""
    N, Cin, T = l.shape
    conv1_w, conv2_w = params["conv1_w"], params["conv2_w"]
    K = conv1_w.shape[2]
    C1, C2 = conv1_w.shape[0], conv2_w.shape[0]
    T1 = T - K + 1
    assert T1 % 2 == 0, "stage-1 MaxPool requires even length"
    T1p = T1 // 2
    T2 = T1p - K + 1
    assert T2 > 0 and T2 % 2 == 0, "stage-2 MaxPool requires even length"
    T2p = T2 // 2
    L1 = params["lin1_w"].shape[0]
    L2 = params["lin2_w"].shape[0]
    assert params["lin1_w"].shape[1] == C2 * T2p, "linear1 in_features mismatch"

    # Stack both Siamese branches (shared weights) and go channels-last.
    x = jnp.concatenate([l, l2], axis=0).astype(jnp.float32)      # (2N, Cin, T)
    x = jnp.transpose(x, (0, 2, 1))                               # (2N, T, Cin)

    def bn_scale_shift(stats, c):
        gamma, beta, mean, var = stats
        scale = gamma / jnp.sqrt(var + eps)
        shift = beta - mean * scale
        return scale.reshape(1, c), shift.reshape(1, c)

    s1, t1 = bn_scale_shift(params["bn1"], C1)
    s2, t2 = bn_scale_shift(params["bn2"], C2)

    wc1 = jnp.transpose(conv1_w, (2, 1, 0))                       # (K, Cin, C1)
    wc2 = jnp.transpose(conv2_w, (2, 1, 0))                       # (K, C1, C2)
    bc1 = params["conv1_b"].reshape(1, C1)
    bc2 = params["conv2_b"].reshape(1, C2)

    # PyTorch flattens (N, C2, T2p) channel-major: feature j = c*T2p + t.
    # The kernel keeps features as (t, c), so store W1 as (T2p, C2, L1) with
    # w1k[t, c, :] = W_pt[:, c*T2p + t].
    w1k = params["lin1_w"].T.reshape(C2, T2p, L1).transpose(1, 0, 2)
    b1 = params["lin1_b"].reshape(1, L1)
    w2 = params["lin2_w"].T
    b2 = params["lin2_b"].reshape(1, L2)
    w3 = params["lin3_w"].T
    b3 = params["lin3_b"].reshape(1, 32)
    w4 = params["lin4_w"].T
    b4 = params["lin4_b"].reshape(1, 1)

    return pl.pallas_call(
        _dural_cnn_kernel,
        out_shape=jax.ShapeDtypeStruct((N, 1), jnp.float32),
        scratch_shapes=[
            pltpu.VMEM((2 * N * T1, C1), jnp.float32),            # conv1+ReLU out
            pltpu.VMEM((2 * N * T2, C2), jnp.float32),            # conv2+ReLU out
        ],
    )(x, wc1, bc1, s1, t1, wc2, bc2, s2, t2,
      w1k, b1, w2, b2, w3, b3, w4, b4)


# ----------------------------------------------------------------------------
# Parameters (synthetic init matching the PyTorch module's initialize_weights)
# ----------------------------------------------------------------------------
def init_params(key, l1_dim, l2_dim, in_channels=26, k=5, c1=64, c2=128, t2p=4):
    ks = jax.random.split(key, 8)

    def conv_w(kk, cout, cin, ksz):
        bound = math.sqrt(6.0 / (cin * ksz))        # kaiming_uniform_ (fan_in, a=0)
        return jax.random.uniform(kk, (cout, cin, ksz), jnp.float32, -bound, bound)

    def lin_w(kk, dout, din):
        std = math.sqrt(2.0 / (din + dout))         # xavier_normal_ (bias = 0)
        return (std * jax.random.normal(kk, (dout, din))).astype(jnp.float32)

    def bn_stats(kk, c):
        # Eval-mode BatchNorm running stats / affine.  A freshly constructed
        # PyTorch module has gamma=1, beta=0, mean=0, var=1; synthetic values
        # are used so the BN path is actually exercised.
        k1, k2, k3, k4 = jax.random.split(kk, 4)
        gamma = jax.random.uniform(k1, (c,), jnp.float32, 0.5, 1.5)
        beta = 0.1 * jax.random.normal(k2, (c,), jnp.float32)
        mean = 0.5 * jax.random.normal(k3, (c,), jnp.float32)
        var = jax.random.uniform(k4, (c,), jnp.float32, 0.5, 1.5)
        return gamma, beta, mean, var

    return {
        "conv1_w": conv_w(ks[0], c1, in_channels, k),
        "conv1_b": jnp.zeros((c1,), jnp.float32),
        "bn1": bn_stats(ks[1], c1),
        "conv2_w": conv_w(ks[2], c2, c1, k),
        "conv2_b": jnp.zeros((c2,), jnp.float32),
        "bn2": bn_stats(ks[3], c2),
        "lin1_w": lin_w(ks[4], l1_dim, c2 * t2p),
        "lin1_b": jnp.zeros((l1_dim,), jnp.float32),
        "lin2_w": lin_w(ks[5], l2_dim, l1_dim),
        "lin2_b": jnp.zeros((l2_dim,), jnp.float32),
        "lin3_w": lin_w(ks[6], 32, l2_dim),
        "lin3_b": jnp.zeros((32,), jnp.float32),
        "lin4_w": lin_w(ks[7], 1, 32),
        "lin4_b": jnp.zeros((1,), jnp.float32),
    }


# ----------------------------------------------------------------------------
# Pure-JAX reference (eval mode), PyTorch NCW semantics — cross-check only
# ----------------------------------------------------------------------------
def reference_forward(l, l2, params, eps=1e-5):
    def conv1d_ncw(x, w, b):                        # x (N,Cin,T), w (Cout,Cin,K)
        K = w.shape[2]
        To = x.shape[2] - K + 1
        acc = jnp.zeros((x.shape[0], w.shape[0], To), jnp.float32)
        for k in range(K):
            acc = acc + jnp.einsum("nct,oc->not", x[:, :, k:k + To], w[:, :, k])
        return acc + b[None, :, None]

    def maxpool2(x):                                # MaxPool1d(2, 2)
        n, c, t = x.shape
        return jnp.max(x.reshape(n, c, t // 2, 2), axis=-1)

    def bn(x, stats):                               # eval-mode BatchNorm1d
        gamma, beta, mean, var = stats
        return ((x - mean[None, :, None]) / jnp.sqrt(var[None, :, None] + eps)
                * gamma[None, :, None] + beta[None, :, None])

    def branch(x):
        h = bn(maxpool2(jax.nn.relu(conv1d_ncw(x, params["conv1_w"],
                                               params["conv1_b"]))), params["bn1"])
        h = bn(maxpool2(jax.nn.relu(conv1d_ncw(h, params["conv2_w"],
                                               params["conv2_b"]))), params["bn2"])
        return h.reshape(h.shape[0], -1)            # Flatten (channel-major)

    d = jnp.abs(branch(l2) - branch(l))
    h = jax.nn.relu(d @ params["lin1_w"].T + params["lin1_b"])
    h = jax.nn.relu(h @ params["lin2_w"].T + params["lin2_b"])
    h = jax.nn.relu(h @ params["lin3_w"].T + params["lin3_b"])
    return h @ params["lin4_w"].T + params["lin4_b"]


if __name__ == "__main__":
    # Conv1d(k=5) twice + MaxPool(2) twice + Linear(512, l1) fixes the spatial
    # size: T=28 -> 24 -> 12 -> 8 -> 4, and 128*4 = 512 = linear1.in_features.
    N, Cin, T = 2, 26, 28
    l1_dim, l2_dim = 128, 64

    key = jax.random.PRNGKey(0)
    kp, ka, kb = jax.random.split(key, 3)
    params = init_params(kp, l1_dim, l2_dim)
    l = jax.random.normal(ka, (N, Cin, T), jnp.float32)
    l2 = jax.random.normal(kb, (N, Cin, T), jnp.float32)

    out = jax.block_until_ready(timeseries_net_dural_cnn_forward(l, l2, params))
    assert out.shape == (N, 1), out.shape
    assert bool(jnp.all(jnp.isfinite(out)))

    with jax.default_matmul_precision("highest"):
        ref = reference_forward(l, l2, params)
    err = float(jnp.max(jnp.abs(out - ref) / (1.0 + jnp.abs(ref))))
    assert err < 5e-2, f"kernel vs reference mismatch: {err}"
    print("KERNEL_OK")
</pallas_src>

<mosaic_0001>
module attributes {stable_mosaic.version = 11 : i64} {
  func.func @_dural_cnn_kernel(%arg0: memref<4x28x26xf32, #tpu.memory_space<vmem>>, %arg1: memref<5x26x64xf32, #tpu.memory_space<vmem>>, %arg2: memref<1x64xf32, #tpu.memory_space<vmem>>, %arg3: memref<1x64xf32, #tpu.memory_space<vmem>>, %arg4: memref<1x64xf32, #tpu.memory_space<vmem>>, %arg5: memref<5x64x128xf32, #tpu.memory_space<vmem>>, %arg6: memref<1x128xf32, #tpu.memory_space<vmem>>, %arg7: memref<1x128xf32, #tpu.memory_space<vmem>>, %arg8: memref<1x128xf32, #tpu.memory_space<vmem>>, %arg9: memref<4x128x128xf32, #tpu.memory_space<vmem>>, %arg10: memref<1x128xf32, #tpu.memory_space<vmem>>, %arg11: memref<128x64xf32, #tpu.memory_space<vmem>>, %arg12: memref<1x64xf32, #tpu.memory_space<vmem>>, %arg13: memref<64x32xf32, #tpu.memory_space<vmem>>, %arg14: memref<1x32xf32, #tpu.memory_space<vmem>>, %arg15: memref<32x1xf32, #tpu.memory_space<vmem>>, %arg16: memref<1x1xf32, #tpu.memory_space<vmem>>, %arg17: memref<2x1xf32, #tpu.memory_space<vmem>>, %arg18: memref<96x64xf32, #tpu.memory_space<vmem>>, %arg19: memref<32x128xf32, #tpu.memory_space<vmem>>) attributes {dimension_semantics = [], scalar_prefetch = 0 : i64, scratch_operands = 2 : i64, tpu.core_type = #tpu.core_type<tc>} {
    %c0 = arith.constant 0 : index
    %c0_0 = arith.constant 0 : index
    %c0_1 = arith.constant 0 : index
    %0 = vector.load %arg0[%c0, %c0_0, %c0_1] : memref<4x28x26xf32, #tpu.memory_space<vmem>>, vector<4x28x26xf32>
    %1 = vector.extract_strided_slice %0 {offsets = [0, 0, 0], sizes = [4, 24, 26], strides = [1, 1, 1]} : vector<4x28x26xf32> to vector<4x24x26xf32>
    %2 = vector.shape_cast %1 : vector<4x24x26xf32> to vector<96x26xf32>
    %c0_2 = arith.constant 0 : index
    %c0_3 = arith.constant 0 : index
    %c0_4 = arith.constant 0 : index
    %3 = vector.load %arg1[%c0_2, %c0_3, %c0_4] : memref<5x26x64xf32, #tpu.memory_space<vmem>>, vector<1x26x64xf32>
    %4 = vector.shape_cast %3 : vector<1x26x64xf32> to vector<26x64xf32>
    %cst = arith.constant dense<0.000000e+00> : vector<96x64xf32>
    %5 = tpu.matmul %2, %4, %cst {dimension_numbers = #tpu.dot_dimension_numbers<[1], [0], [0], [1], [0, 0, 1, 1], [], []>} : vector<96x26xf32>, vector<26x64xf32>, vector<96x64xf32> -> vector<96x64xf32>
    %6 = vector.extract_strided_slice %0 {offsets = [0, 1, 0], sizes = [4, 24, 26], strides = [1, 1, 1]} : vector<4x28x26xf32> to vector<4x24x26xf32>
    %7 = vector.shape_cast %6 : vector<4x24x26xf32> to vector<96x26xf32>
    %c1 = arith.constant 1 : index
    %c0_5 = arith.constant 0 : index
    %c0_6 = arith.constant 0 : index
    %8 = vector.load %arg1[%c1, %c0_5, %c0_6] : memref<5x26x64xf32, #tpu.memory_space<vmem>>, vector<1x26x64xf32>
    %9 = vector.shape_cast %8 : vector<1x26x64xf32> to vector<26x64xf32>
    %cst_7 = arith.constant dense<0.000000e+00> : vector<96x64xf32>
    %10 = tpu.matmul %7, %9, %cst_7 {dimension_numbers = #tpu.dot_dimension_numbers<[1], [0], [0], [1], [0, 0, 1, 1], [], []>} : vector<96x26xf32>, vector<26x64xf32>, vector<96x64xf32> -> vector<96x64xf32>
    %11 = arith.addf %5, %10 : vector<96x64xf32>
    %12 = vector.extract_strided_slice %0 {offsets = [0, 2, 0], sizes = [4, 24, 26], strides = [1, 1, 1]} : vector<4x28x26xf32> to vector<4x24x26xf32>
    %13 = vector.shape_cast %12 : vector<4x24x26xf32> to vector<96x26xf32>
    %c2 = arith.constant 2 : index
    %c0_8 = arith.constant 0 : index
    %c0_9 = arith.constant 0 : index
    %14 = vector.load %arg1[%c2, %c0_8, %c0_9] : memref<5x26x64xf32, #tpu.memory_space<vmem>>, vector<1x26x64xf32>
    %15 = vector.shape_cast %14 : vector<1x26x64xf32> to vector<26x64xf32>
    %cst_10 = arith.constant dense<0.000000e+00> : vector<96x64xf32>
    %16 = tpu.matmul %13, %15, %cst_10 {dimension_numbers = #tpu.dot_dimension_numbers<[1], [0], [0], [1], [0, 0, 1, 1], [], []>} : vector<96x26xf32>, vector<26x64xf32>, vector<96x64xf32> -> vector<96x64xf32>
    %17 = arith.addf %11, %16 : vector<96x64xf32>
    %18 = vector.extract_strided_slice %0 {offsets = [0, 3, 0], sizes = [4, 24, 26], strides = [1, 1, 1]} : vector<4x28x26xf32> to vector<4x24x26xf32>
    %19 = vector.shape_cast %18 : vector<4x24x26xf32> to vector<96x26xf32>
    %c3 = arith.constant 3 : index
    %c0_11 = arith.constant 0 : index
    %c0_12 = arith.constant 0 : index
    %20 = vector.load %arg1[%c3, %c0_11, %c0_12] : memref<5x26x64xf32, #tpu.memory_space<vmem>>, vector<1x26x64xf32>
    %21 = vector.shape_cast %20 : vector<1x26x64xf32> to vector<26x64xf32>
    %cst_13 = arith.constant dense<0.000000e+00> : vector<96x64xf32>
    %22 = tpu.matmul %19, %21, %cst_13 {dimension_numbers = #tpu.dot_dimension_numbers<[1], [0], [0], [1], [0, 0, 1, 1], [], []>} : vector<96x26xf32>, vector<26x64xf32>, vector<96x64xf32> -> vector<96x64xf32>
    %23 = arith.addf %17, %22 : vector<96x64xf32>
    %24 = vector.extract_strided_slice %0 {offsets = [0, 4, 0], sizes = [4, 24, 26], strides = [1, 1, 1]} : vector<4x28x26xf32> to vector<4x24x26xf32>
    %25 = vector.shape_cast %24 : vector<4x24x26xf32> to vector<96x26xf32>
    %c4 = arith.constant 4 : index
    %c0_14 = arith.constant 0 : index
    %c0_15 = arith.constant 0 : index
    %26 = vector.load %arg1[%c4, %c0_14, %c0_15] : memref<5x26x64xf32, #tpu.memory_space<vmem>>, vector<1x26x64xf32>
    %27 = vector.shape_cast %26 : vector<1x26x64xf32> to vector<26x64xf32>
    %cst_16 = arith.constant dense<0.000000e+00> : vector<96x64xf32>
    %28 = tpu.matmul %25, %27, %cst_16 {dimension_numbers = #tpu.dot_dimension_numbers<[1], [0], [0], [1], [0, 0, 1, 1], [], []>} : vector<96x26xf32>, vector<26x64xf32>, vector<96x64xf32> -> vector<96x64xf32>
    %29 = arith.addf %23, %28 : vector<96x64xf32>
    %c0_17 = arith.constant 0 : index
    %c0_18 = arith.constant 0 : index
    %30 = vector.load %arg2[%c0_17, %c0_18] : memref<1x64xf32, #tpu.memory_space<vmem>>, vector<1x64xf32>
    %31 = vector.broadcast %30 : vector<1x64xf32> to vector<96x64xf32>
    %32 = arith.addf %29, %31 : vector<96x64xf32>
    %cst_19 = arith.constant 0.000000e+00 : f32
    %33 = vector.broadcast %cst_19 : f32 to vector<96x64xf32>
    %34 = arith.maximumf %32, %33 : vector<96x64xf32>
    %c0_20 = arith.constant 0 : index
    %c0_21 = arith.constant 0 : index
    %35 = vector.load %arg18[%c0_20, %c0_21] : memref<96x64xf32, #tpu.memory_space<vmem>>, vector<96x64xf32>
    tpu.vector_store %arg18[%c0_20, %c0_21], %34 {strides = array<i32>} : memref<96x64xf32, #tpu.memory_space<vmem>>, vector<96x64xf32>,
    %c0_22 = arith.constant 0 : index
    %c0_23 = arith.constant 0 : index
    %36 = tpu.strided_load %arg18[%c0_22, %c0_23] {strides = array<i32: 2, 1>} : memref<96x64xf32, #tpu.memory_space<vmem>>, vector<48x64xf32>
    %c1_24 = arith.constant 1 : index
    %c0_25 = arith.constant 0 : index
    %37 = tpu.strided_load %arg18[%c1_24, %c0_25] {strides = array<i32: 2, 1>} : memref<96x64xf32, #tpu.memory_space<vmem>>, vector<48x64xf32>
    %38 = arith.maximumf %36, %37 : vector<48x64xf32>
    %c0_26 = arith.constant 0 : index
    %c0_27 = arith.constant 0 : index
    %39 = vector.load %arg3[%c0_26, %c0_27] : memref<1x64xf32, #tpu.memory_space<vmem>>, vector<1x64xf32>
    %40 = vector.broadcast %39 : vector<1x64xf32> to vector<48x64xf32>
    %41 = arith.mulf %38, %40 : vector<48x64xf32>
    %c0_28 = arith.constant 0 : index
    %c0_29 = arith.constant 0 : index
    %42 = vector.load %arg4[%c0_28, %c0_29] : memref<1x64xf32, #tpu.memory_space<vmem>>, vector<1x64xf32>
    %43 = vector.broadcast %42 : vector<1x64xf32> to vector<48x64xf32>
    %44 = arith.addf %41, %43 : vector<48x64xf32>
    %45 = vector.shape_cast %44 : vector<48x64xf32> to vector<4x12x64xf32>
    %46 = vector.extract_strided_slice %45 {offsets = [0, 0, 0], sizes = [4, 8, 64], strides = [1, 1, 1]} : vector<4x12x64xf32> to vector<4x8x64xf32>
    %47 = vector.shape_cast %46 : vector<4x8x64xf32> to vector<32x64xf32>
    %c0_30 = arith.constant 0 : index
    %c0_31 = arith.constant 0 : index
    %c0_32 = arith.constant 0 : index
    %48 = vector.load %arg5[%c0_30, %c0_31, %c0_32] : memref<5x64x128xf32, #tpu.memory_space<vmem>>, vector<1x64x128xf32>
    %49 = vector.shape_cast %48 : vector<1x64x128xf32> to vector<64x128xf32>
    %cst_33 = arith.constant dense<0.000000e+00> : vector<32x128xf32>
    %50 = tpu.matmul %47, %49, %cst_33 {dimension_numbers = #tpu.dot_dimension_numbers<[1], [0], [0], [1], [0, 0, 1, 1], [], []>} : vector<32x64xf32>, vector<64x128xf32>, vector<32x128xf32> -> vector<32x128xf32>
    %51 = vector.extract_strided_slice %45 {offsets = [0, 1, 0], sizes = [4, 8, 64], strides = [1, 1, 1]} : vector<4x12x64xf32> to vector<4x8x64xf32>
    %52 = vector.shape_cast %51 : vector<4x8x64xf32> to vector<32x64xf32>
    %c1_34 = arith.constant 1 : index
    %c0_35 = arith.constant 0 : index
    %c0_36 = arith.constant 0 : index
    %53 = vector.load %arg5[%c1_34, %c0_35, %c0_36] : memref<5x64x128xf32, #tpu.memory_space<vmem>>, vector<1x64x128xf32>
    %54 = vector.shape_cast %53 : vector<1x64x128xf32> to vector<64x128xf32>
    %cst_37 = arith.constant dense<0.000000e+00> : vector<32x128xf32>
    %55 = tpu.matmul %52, %54, %cst_37 {dimension_numbers = #tpu.dot_dimension_numbers<[1], [0], [0], [1], [0, 0, 1, 1], [], []>} : vector<32x64xf32>, vector<64x128xf32>, vector<32x128xf32> -> vector<32x128xf32>
    %56 = arith.addf %50, %55 : vector<32x128xf32>
    %57 = vector.extract_strided_slice %45 {offsets = [0, 2, 0], sizes = [4, 8, 64], strides = [1, 1, 1]} : vector<4x12x64xf32> to vector<4x8x64xf32>
    %58 = vector.shape_cast %57 : vector<4x8x64xf32> to vector<32x64xf32>
    %c2_38 = arith.constant 2 : index
    %c0_39 = arith.constant 0 : index
    %c0_40 = arith.constant 0 : index
    %59 = vector.load %arg5[%c2_38, %c0_39, %c0_40] : memref<5x64x128xf32, #tpu.memory_space<vmem>>, vector<1x64x128xf32>
    %60 = vector.shape_cast %59 : vector<1x64x128xf32> to vector<64x128xf32>
    %cst_41 = arith.constant dense<0.000000e+00> : vector<32x128xf32>
    %61 = tpu.matmul %58, %60, %cst_41 {dimension_numbers = #tpu.dot_dimension_numbers<[1], [0], [0], [1], [0, 0, 1, 1], [], []>} : vector<32x64xf32>, vector<64x128xf32>, vector<32x128xf32> -> vector<32x128xf32>
    %62 = arith.addf %56, %61 : vector<32x128xf32>
    %63 = vector.extract_strided_slice %45 {offsets = [0, 3, 0], sizes = [4, 8, 64], strides = [1, 1, 1]} : vector<4x12x64xf32> to vector<4x8x64xf32>
    %64 = vector.shape_cast %63 : vector<4x8x64xf32> to vector<32x64xf32>
    %c3_42 = arith.constant 3 : index
    %c0_43 = arith.constant 0 : index
    %c0_44 = arith.constant 0 : index
    %65 = vector.load %arg5[%c3_42, %c0_43, %c0_44] : memref<5x64x128xf32, #tpu.memory_space<vmem>>, vector<1x64x128xf32>
    %66 = vector.shape_cast %65 : vector<1x64x128xf32> to vector<64x128xf32>
    %cst_45 = arith.constant dense<0.000000e+00> : vector<32x128xf32>
    %67 = tpu.matmul %64, %66, %cst_45 {dimension_numbers = #tpu.dot_dimension_numbers<[1], [0], [0], [1], [0, 0, 1, 1], [], []>} : vector<32x64xf32>, vector<64x128xf32>, vector<32x128xf32> -> vector<32x128xf32>
    %68 = arith.addf %62, %67 : vector<32x128xf32>
    %69 = vector.extract_strided_slice %45 {offsets = [0, 4, 0], sizes = [4, 8, 64], strides = [1, 1, 1]} : vector<4x12x64xf32> to vector<4x8x64xf32>
    %70 = vector.shape_cast %69 : vector<4x8x64xf32> to vector<32x64xf32>
    %c4_46 = arith.constant 4 : index
    %c0_47 = arith.constant 0 : index
    %c0_48 = arith.constant 0 : index
    %71 = vector.load %arg5[%c4_46, %c0_47, %c0_48] : memref<5x64x128xf32, #tpu.memory_space<vmem>>, vector<1x64x128xf32>
    %72 = vector.shape_cast %71 : vector<1x64x128xf32> to vector<64x128xf32>
    %cst_49 = arith.constant dense<0.000000e+00> : vector<32x128xf32>
    %73 = tpu.matmul %70, %72, %cst_49 {dimension_numbers = #tpu.dot_dimension_numbers<[1], [0], [0], [1], [0, 0, 1, 1], [], []>} : vector<32x64xf32>, vector<64x128xf32>, vector<32x128xf32> -> vector<32x128xf32>
    %74 = arith.addf %68, %73 : vector<32x128xf32>
    %c0_50 = arith.constant 0 : index
    %c0_51 = arith.constant 0 : index
    %75 = vector.load %arg6[%c0_50, %c0_51] : memref<1x128xf32, #tpu.memory_space<vmem>>, vector<1x128xf32>
    %76 = vector.broadcast %75 : vector<1x128xf32> to vector<32x128xf32>
    %77 = arith.addf %74, %76 : vector<32x128xf32>
    %cst_52 = arith.constant 0.000000e+00 : f32
    %78 = vector.broadcast %cst_52 : f32 to vector<32x128xf32>
    %79 = arith.maximumf %77, %78 : vector<32x128xf32>
    %c0_53 = arith.constant 0 : index
    %c0_54 = arith.constant 0 : index
    %80 = vector.load %arg19[%c0_53, %c0_54] : memref<32x128xf32, #tpu.memory_space<vmem>>, vector<32x128xf32>
    tpu.vector_store %arg19[%c0_53, %c0_54], %79 {strides = array<i32>} : memref<32x128xf32, #tpu.memory_space<vmem>>, vector<32x128xf32>,
    %c0_55 = arith.constant 0 : index
    %c0_56 = arith.constant 0 : index
    %81 = tpu.strided_load %arg19[%c0_55, %c0_56] {strides = array<i32: 2, 1>} : memref<32x128xf32, #tpu.memory_space<vmem>>, vector<16x128xf32>
    %c1_57 = arith.constant 1 : index
    %c0_58 = arith.constant 0 : index
    %82 = tpu.strided_load %arg19[%c1_57, %c0_58] {strides = array<i32: 2, 1>} : memref<32x128xf32, #tpu.memory_space<vmem>>, vector<16x128xf32>
    %83 = arith.maximumf %81, %82 : vector<16x128xf32>
    %c0_59 = arith.constant 0 : index
    %c0_60 = arith.constant 0 : index
    %84 = vector.load %arg7[%c0_59, %c0_60] : memref<1x128xf32, #tpu.memory_space<vmem>>, vector<1x128xf32>
    %85 = vector.broadcast %84 : vector<1x128xf32> to vector<16x128xf32>
    %86 = arith.mulf %83, %85 : vector<16x128xf32>
    %c0_61 = arith.constant 0 : index
    %c0_62 = arith.constant 0 : index
    %87 = vector.load %arg8[%c0_61, %c0_62] : memref<1x128xf32, #tpu.memory_space<vmem>>, vector<1x128xf32>
    %88 = vector.broadcast %87 : vector<1x128xf32> to vector<16x128xf32>
    %89 = arith.addf %86, %88 : vector<16x128xf32>
    %90 = vector.extract_strided_slice %89 {offsets = [0, 0], sizes = [8, 128], strides = [1, 1]} : vector<16x128xf32> to vector<8x128xf32>
    %91 = vector.extract_strided_slice %89 {offsets = [8, 0], sizes = [8, 128], strides = [1, 1]} : vector<16x128xf32> to vector<8x128xf32>
    %92 = arith.subf %91, %90 : vector<8x128xf32>
    %93 = math.absf %92 : vector<8x128xf32>
    %94 = vector.shape_cast %93 : vector<8x128xf32> to vector<2x4x128xf32>
    %95 = vector.extract_strided_slice %94 {offsets = [0, 0, 0], sizes = [2, 1, 128], strides = [1, 1, 1]} : vector<2x4x128xf32> to vector<2x1x128xf32>
    %96 = vector.shape_cast %95 : vector<2x1x128xf32> to vector<2x128xf32>
    %c0_63 = arith.constant 0 : index
    %c0_64 = arith.constant 0 : index
    %c0_65 = arith.constant 0 : index
    %97 = vector.load %arg9[%c0_63, %c0_64, %c0_65] : memref<4x128x128xf32, #tpu.memory_space<vmem>>, vector<1x128x128xf32>
    %98 = vector.shape_cast %97 : vector<1x128x128xf32> to vector<128x128xf32>
    %cst_66 = arith.constant dense<0.000000e+00> : vector<2x128xf32>
    %99 = tpu.matmul %96, %98, %cst_66 {dimension_numbers = #tpu.dot_dimension_numbers<[1], [0], [0], [1], [0, 0, 1, 1], [], []>} : vector<2x128xf32>, vector<128x128xf32>, vector<2x128xf32> -> vector<2x128xf32>
    %100 = vector.extract_strided_slice %94 {offsets = [0, 1, 0], sizes = [2, 1, 128], strides = [1, 1, 1]} : vector<2x4x128xf32> to vector<2x1x128xf32>
    %101 = vector.shape_cast %100 : vector<2x1x128xf32> to vector<2x128xf32>
    %c1_67 = arith.constant 1 : index
    %c0_68 = arith.constant 0 : index
    %c0_69 = arith.constant 0 : index
    %102 = vector.load %arg9[%c1_67, %c0_68, %c0_69] : memref<4x128x128xf32, #tpu.memory_space<vmem>>, vector<1x128x128xf32>
    %103 = vector.shape_cast %102 : vector<1x128x128xf32> to vector<128x128xf32>
    %cst_70 = arith.constant dense<0.000000e+00> : vector<2x128xf32>
    %104 = tpu.matmul %101, %103, %cst_70 {dimension_numbers = #tpu.dot_dimension_numbers<[1], [0], [0], [1], [0, 0, 1, 1], [], []>} : vector<2x128xf32>, vector<128x128xf32>, vector<2x128xf32> -> vector<2x128xf32>
    %105 = arith.addf %99, %104 : vector<2x128xf32>
    %106 = vector.extract_strided_slice %94 {offsets = [0, 2, 0], sizes = [2, 1, 128], strides = [1, 1, 1]} : vector<2x4x128xf32> to vector<2x1x128xf32>
    %107 = vector.shape_cast %106 : vector<2x1x128xf32> to vector<2x128xf32>
    %c2_71 = arith.constant 2 : index
    %c0_72 = arith.constant 0 : index
    %c0_73 = arith.constant 0 : index
    %108 = vector.load %arg9[%c2_71, %c0_72, %c0_73] : memref<4x128x128xf32, #tpu.memory_space<vmem>>, vector<1x128x128xf32>
    %109 = vector.shape_cast %108 : vector<1x128x128xf32> to vector<128x128xf32>
    %cst_74 = arith.constant dense<0.000000e+00> : vector<2x128xf32>
    %110 = tpu.matmul %107, %109, %cst_74 {dimension_numbers = #tpu.dot_dimension_numbers<[1], [0], [0], [1], [0, 0, 1, 1], [], []>} : vector<2x128xf32>, vector<128x128xf32>, vector<2x128xf32> -> vector<2x128xf32>
    %111 = arith.addf %105, %110 : vector<2x128xf32>
    %112 = vector.extract_strided_slice %94 {offsets = [0, 3, 0], sizes = [2, 1, 128], strides = [1, 1, 1]} : vector<2x4x128xf32> to vector<2x1x128xf32>
    %113 = vector.shape_cast %112 : vector<2x1x128xf32> to vector<2x128xf32>
    %c3_75 = arith.constant 3 : index
    %c0_76 = arith.constant 0 : index
    %c0_77 = arith.constant 0 : index
    %114 = vector.load %arg9[%c3_75, %c0_76, %c0_77] : memref<4x128x128xf32, #tpu.memory_space<vmem>>, vector<1x128x128xf32>
    %115 = vector.shape_cast %114 : vector<1x128x128xf32> to vector<128x128xf32>
    %cst_78 = arith.constant dense<0.000000e+00> : vector<2x128xf32>
    %116 = tpu.matmul %113, %115, %cst_78 {dimension_numbers = #tpu.dot_dimension_numbers<[1], [0], [0], [1], [0, 0, 1, 1], [], []>} : vector<2x128xf32>, vector<128x128xf32>, vector<2x128xf32> -> vector<2x128xf32>
    %117 = arith.addf %111, %116 : vector<2x128xf32>
    %c0_79 = arith.constant 0 : index
    %c0_80 = arith.constant 0 : index
    %118 = vector.load %arg10[%c0_79, %c0_80] : memref<1x128xf32, #tpu.memory_space<vmem>>, vector<1x128xf32>
    %119 = vector.broadcast %118 : vector<1x128xf32> to vector<2x128xf32>
    %120 = arith.addf %117, %119 : vector<2x128xf32>
    %cst_81 = arith.constant 0.000000e+00 : f32
    %121 = vector.broadcast %cst_81 : f32 to vector<2x128xf32>
    %122 = arith.maximumf %120, %121 : vector<2x128xf32>
    %c0_82 = arith.constant 0 : index
    %c0_83 = arith.constant 0 : index
    %123 = vector.load %arg11[%c0_82, %c0_83] : memref<128x64xf32, #tpu.memory_space<vmem>>, vector<128x64xf32>
    %cst_84 = arith.constant dense<0.000000e+00> : vector<2x64xf32>
    %124 = tpu.matmul %122, %123, %cst_84 {dimension_numbers = #tpu.dot_dimension_numbers<[1], [0], [0], [1], [0, 0, 1, 1], [], []>} : vector<2x128xf32>, vector<128x64xf32>, vector<2x64xf32> -> vector<2x64xf32>
    %c0_85 = arith.constant 0 : index
    %c0_86 = arith.constant 0 : index
    %125 = vector.load %arg12[%c0_85, %c0_86] : memref<1x64xf32, #tpu.memory_space<vmem>>, vector<1x64xf32>
    %126 = vector.broadcast %125 : vector<1x64xf32> to vector<2x64xf32>
    %127 = arith.addf %124, %126 : vector<2x64xf32>
    %cst_87 = arith.constant 0.000000e+00 : f32
    %128 = vector.broadcast %cst_87 : f32 to vector<2x64xf32>
    %129 = arith.maximumf %127, %128 : vector<2x64xf32>
    %c0_88 = arith.constant 0 : index
    %c0_89 = arith.constant 0 : index
    %130 = vector.load %arg13[%c0_88, %c0_89] : memref<64x32xf32, #tpu.memory_space<vmem>>, vector<64x32xf32>
    %cst_90 = arith.constant dense<0.000000e+00> : vector<2x32xf32>
    %131 = tpu.matmul %129, %130, %cst_90 {dimension_numbers = #tpu.dot_dimension_numbers<[1], [0], [0], [1], [0, 0, 1, 1], [], []>} : vector<2x64xf32>, vector<64x32xf32>, vector<2x32xf32> -> vector<2x32xf32>
    %c0_91 = arith.constant 0 : index
    %c0_92 = arith.constant 0 : index
    %132 = vector.load %arg14[%c0_91, %c0_92] : memref<1x32xf32, #tpu.memory_space<vmem>>, vector<1x32xf32>
    %133 = vector.broadcast %132 : vector<1x32xf32> to vector<2x32xf32>
    %134 = arith.addf %131, %133 : vector<2x32xf32>
    %cst_93 = arith.constant 0.000000e+00 : f32
    %135 = vector.broadcast %cst_93 : f32 to vector<2x32xf32>
    %136 = arith.maximumf %134, %135 : vector<2x32xf32>
    %c0_94 = arith.constant 0 : index
    %c0_95 = arith.constant 0 : index
    %137 = vector.load %arg15[%c0_94, %c0_95] : memref<32x1xf32, #tpu.memory_space<vmem>>, vector<32x1xf32>
    %cst_96 = arith.constant dense<0.000000e+00> : vector<2x1xf32>
    %138 = tpu.matmul %136, %137, %cst_96 {dimension_numbers = #tpu.dot_dimension_numbers<[1], [0], [0], [1], [0, 0, 1, 1], [], []>} : vector<2x32xf32>, vector<32x1xf32>, vector<2x1xf32> -> vector<2x1xf32>
    %c0_97 = arith.constant 0 : index
    %c0_98 = arith.constant 0 : index
    %139 = vector.load %arg16[%c0_97, %c0_98] : memref<1x1xf32, #tpu.memory_space<vmem>>, vector<1x1xf32>
    %140 = vector.broadcast %139 : vector<1x1xf32> to vector<2x1xf32>
    %141 = arith.addf %138, %140 : vector<2x1xf32>
    %c0_99 = arith.constant 0 : index
    %c0_100 = arith.constant 0 : index
    %142 = vector.load %arg17[%c0_99, %c0_100] : memref<2x1xf32, #tpu.memory_space<vmem>>, vector<2x1xf32>
    tpu.vector_store %arg17[%c0_99, %c0_100], %141 {strides = array<i32>} : memref<2x1xf32, #tpu.memory_space<vmem>>, vector<2x1xf32>,
    return
  }
}

</mosaic_0001>

<llo_original>
// kernel: tpu_custom_call.1
$region0: #{tpu_custom_call.1}
  #allocation0 [shape = 'u32[]', space=smem, size = 0x4, offset = 0x4, fixed_abs, tag = 'smem constant byte address 0x4 - core index']
  #allocation1 [shape = 'u32[72,128]{1,0:T(1,128)}', space=vmem, size = 0x9000, scoped, tag = 'internal scratch']
  #allocation2 [shape = 'f32[96,64]{1,0:T(8,128)}', space=vmem, size = 0xc000, scoped, tag = 'scratch operand']
  #allocation3 [shape = 'f32[32,128]{1,0:T(8,128)}', space=vmem, size = 0x4000, scoped, tag = 'scratch operand']
  #allocation4 [shape = 'f32[1,1]{1,0:T(1,128)S(1)}', space=vmem, size = 0x200, scoped, tag = 'scoped memory for tpu_custom_call.1']
  %s0 = inlined_call_operand.vmem [shape: f32[4,28,26], index: 0, kind: input, shape index: {}]
  %s1 = inlined_call_operand.hbm [shape: f32[5,26,64], index: 1, kind: input, shape index: {}]
  %s2 = inlined_call_operand.vmem [shape: f32[1,64], index: 2, kind: input, shape index: {}]
  %s3 = inlined_call_operand.vmem [shape: f32[1,64], index: 3, kind: input, shape index: {}]
  %s4 = inlined_call_operand.vmem [shape: f32[1,64], index: 4, kind: input, shape index: {}]
  %s5 = inlined_call_operand.vmem [shape: f32[5,64,128], index: 5, kind: input, shape index: {}]
  %s6 = inlined_call_operand.vmem [shape: f32[1,128], index: 6, kind: input, shape index: {}]
  %s7 = inlined_call_operand.vmem [shape: f32[1,128], index: 7, kind: input, shape index: {}]
  %s8 = inlined_call_operand.vmem [shape: f32[1,128], index: 8, kind: input, shape index: {}]
  %s9 = inlined_call_operand.hbm [shape: f32[4,128,128], index: 9, kind: input, shape index: {}]
  %s10 = inlined_call_operand.vmem [shape: f32[1,128], index: 10, kind: input, shape index: {}]
  %s11 = inlined_call_operand.vmem [shape: f32[128,64], index: 11, kind: input, shape index: {}]
  %s12 = inlined_call_operand.vmem [shape: f32[1,64], index: 12, kind: input, shape index: {}]
  %s13 = inlined_call_operand.vmem [shape: f32[64,32], index: 13, kind: input, shape index: {}]
  %s14 = inlined_call_operand.vmem [shape: f32[1,32], index: 14, kind: input, shape index: {}]
  %s15 = inlined_call_operand.vmem [shape: f32[32,1], index: 15, kind: input, shape index: {}]
  %s16 = inlined_call_operand.<no memory space> [shape: f32[1,1], index: 16, kind: input, shape index: {}]
  %s17 = inlined_call_operand.vmem [shape: f32[2,1], index: 17, kind: output, shape index: {}]
  %s18 = sld [smem:[#allocation0]]
  $region86: #{tpu_custom_call.1} parent=0
    _
  %s20 = ssub.s32 1, %s18
  %s21 = scalar_select 0, %s20, %s18
  %v22 = vstv %s16
  %23 = vst [vmem:[#allocation4] sm:$0x1] %v22
  $region1: #{tpu_custom_call.1} parent=0
    #allocation5 [shape = 'u8[81920]{0}', space=vmem, size = 0x14000, scoped, tag = 'input window, operand 1, single buffered']
    #allocation6 [shape = 's32[1]{0}', space=sflag, size = 0x4, scoped, tag = 'scoped memory for tpu_custom_call.1']
    #allocation7 [shape = 'u8[262144]{0}', space=vmem, size = 0x40000, scoped, tag = 'input window, operand 9, single buffered']
    #allocation8 [shape = 's32[1]{0}', space=sflag, size = 0x4, scoped, tag = 'scoped memory for tpu_custom_call.1']
    %24 = vsyncpa [#allocation6], 0
    %25 = vsyncpa [#allocation8], 0
    // Predicated region
    $region2: #{tpu_custom_call.1} parent=1 // pred_check
      _
    $region3: #{tpu_custom_call.1} parent=1 // pred_check_branch
      %27 = sbr.rel (0) target = $region5
    $region4: #{tpu_custom_call.1} parent=1 // pred_region
      _
    $region5: #{tpu_custom_call.1} parent=1 // pred_fallthru
      _
    // Predicated region
    $region6: #{tpu_custom_call.1} parent=1 // pred_check
      _
    $region7: #{tpu_custom_call.1} parent=1 // pred_check_branch
      %29 = sbr.rel (0) target = $region9
    $region8: #{tpu_custom_call.1} parent=1 // pred_region
      %31 = vsyncadd [#allocation6], 0
      %s32 = sshll.u32 %s1, 4
      %s33 = int_to_ptr.hbm [resolvable:$true] %s32
      %s34 = sshll.u32 [#allocation5], 4
      %s35 = int_to_ptr.vmem [resolvable:$true] %s34
      %40 = dma.hbm_to_vmem [thread:$0]  %s33, 2560, %s35, [#allocation6], 128, 128, 8
    $region9: #{tpu_custom_call.1} parent=1 // pred_fallthru
      _
    // Predicated region
    $region10: #{tpu_custom_call.1} parent=1 // pred_check
      _
    $region11: #{tpu_custom_call.1} parent=1 // pred_check_branch
      %42 = sbr.rel (0) target = $region13
    $region12: #{tpu_custom_call.1} parent=1 // pred_region
      _
    $region13: #{tpu_custom_call.1} parent=1 // pred_fallthru
      _
    // Predicated region
    $region14: #{tpu_custom_call.1} parent=1 // pred_check
      _
    $region15: #{tpu_custom_call.1} parent=1 // pred_check_branch
      %44 = sbr.rel (0) target = $region17
    $region16: #{tpu_custom_call.1} parent=1 // pred_region
      _
    $region17: #{tpu_custom_call.1} parent=1 // pred_fallthru
      _
    // Predicated region
    $region18: #{tpu_custom_call.1} parent=1 // pred_check
      _
    $region19: #{tpu_custom_call.1} parent=1 // pred_check_branch
      %46 = sbr.rel (0) target = $region21
    $region20: #{tpu_custom_call.1} parent=1 // pred_region
      _
    $region21: #{tpu_custom_call.1} parent=1 // pred_fallthru
      _
    // Predicated region
    $region22: #{tpu_custom_call.1} parent=1 // pred_check
      _
    $region23: #{tpu_custom_call.1} parent=1 // pred_check_branch
      %48 = sbr.rel (0) target = $region25
    $region24: #{tpu_custom_call.1} parent=1 // pred_region
      _
    $region25: #{tpu_custom_call.1} parent=1 // pred_fallthru
      _
    // Predicated region
    $region26: #{tpu_custom_call.1} parent=1 // pred_check
      _
    $region27: #{tpu_custom_call.1} parent=1 // pred_check_branch
      %50 = sbr.rel (0) target = $region29
    $region28: #{tpu_custom_call.1} parent=1 // pred_region
      _
    $region29: #{tpu_custom_call.1} parent=1 // pred_fallthru
      _
    // Predicated region
    $region30: #{tpu_custom_call.1} parent=1 // pred_check
      _
    $region31: #{tpu_custom_call.1} parent=1 // pred_check_branch
      %52 = sbr.rel (0) target = $region33
    $region32: #{tpu_custom_call.1} parent=1 // pred_region
      _
    $region33: #{tpu_custom_call.1} parent=1 // pred_fallthru
      _
    // Predicated region
    $region34: #{tpu_custom_call.1} parent=1 // pred_check
      _
    $region35: #{tpu_custom_call.1} parent=1 // pred_check_branch
      %54 = sbr.rel (0) target = $region37
    $region36: #{tpu_custom_call.1} parent=1 // pred_region
      _
    $region37: #{tpu_custom_call.1} parent=1 // pred_fallthru
      _
    // Predicated region
    $region38: #{tpu_custom_call.1} parent=1 // pred_check
      _
    $region39: #{tpu_custom_call.1} parent=1 // pred_check_branch
      %56 = sbr.rel (0) target = $region41
    $region40: #{tpu_custom_call.1} parent=1 // pred_region
      %58 = vsyncadd [#allocation8], 0
      %s59 = sshll.u32 %s9, 4
      %s60 = int_to_ptr.hbm [resolvable:$true] %s59
      %s61 = sshll.u32 [#allocation7], 4
      %s62 = int_to_ptr.vmem [resolvable:$true] %s61
      %67 = dma.hbm_to_vmem [thread:$0]  %s60, 8192, %s62, [#allocation8], 128, 128, 8
    $region41: #{tpu_custom_call.1} parent=1 // pred_fallthru
      _
    // Predicated region
    $region42: #{tpu_custom_call.1} parent=1 // pred_check
      _
    $region43: #{tpu_custom_call.1} parent=1 // pred_check_branch
      %69 = sbr.rel (0) target = $region45
    $region44: #{tpu_custom_call.1} parent=1 // pred_region
      _
    $region45: #{tpu_custom_call.1} parent=1 // pred_fallthru
      _
    // Predicated region
    $region46: #{tpu_custom_call.1} parent=1 // pred_check
      _
    $region47: #{tpu_custom_call.1} parent=1 // pred_check_branch
      %71 = sbr.rel (0) target = $region49
    $region48: #{tpu_custom_call.1} parent=1 // pred_region
      _
    $region49: #{tpu_custom_call.1} parent=1 // pred_fallthru
      _
    // Predicated region
    $region50: #{tpu_custom_call.1} parent=1 // pred_check
      _
    $region51: #{tpu_custom_call.1} parent=1 // pred_check_branch
      %73 = sbr.rel (0) target = $region53
    $region52: #{tpu_custom_call.1} parent=1 // pred_region
      _
    $region53: #{tpu_custom_call.1} parent=1 // pred_fallthru
      _
    // Predicated region
    $region54: #{tpu_custom_call.1} parent=1 // pred_check
      _
    $region55: #{tpu_custom_call.1} parent=1 // pred_check_branch
      %75 = sbr.rel (0) target = $region57
    $region56: #{tpu_custom_call.1} parent=1 // pred_region
      _
    $region57: #{tpu_custom_call.1} parent=1 // pred_fallthru
      _
    // Predicated region
    $region58: #{tpu_custom_call.1} parent=1 // pred_check
      _
    $region59: #{tpu_custom_call.1} parent=1 // pred_check_branch
      %77 = sbr.rel (0) target = $region61
    $region60: #{tpu_custom_call.1} parent=1 // pred_region
      _
    $region61: #{tpu_custom_call.1} parent=1 // pred_fallthru
      _
    // Predicated region
    $region62: #{tpu_custom_call.1} parent=1 // pred_check
      _
    $region63: #{tpu_custom_call.1} parent=1 // pred_check_branch
      %79 = sbr.rel (0) target = $region65
    $region64: #{tpu_custom_call.1} parent=1 // pred_region
      _
    $region65: #{tpu_custom_call.1} parent=1 // pred_fallthru
      _
    // Predicated region
    $region66: #{tpu_custom_call.1} parent=1 // pred_check
      _
    $region67: #{tpu_custom_call.1} parent=1 // pred_check_branch
      %81 = sbr.rel (0) target = $region69
    $region68: #{tpu_custom_call.1} parent=1 // pred_region
      _
    $region69: #{tpu_custom_call.1} parent=1 // pred_fallthru
      _
    // Predicated region
    $region70: #{tpu_custom_call.1} parent=1 // pred_check
      _
    $region71: #{tpu_custom_call.1} parent=1 // pred_check_branch
      %83 = sbr.rel (0) target = $region73
    $region72: #{tpu_custom_call.1} parent=1 // pred_region
      %85 = dma.done [#allocation6], 2560
    $region73: #{tpu_custom_call.1} parent=1 // pred_fallthru
      _
    // Predicated region
    $region74: #{tpu_custom_call.1} parent=1 // pred_check
      _
    $region75: #{tpu_custom_call.1} parent=1 // pred_check_branch
      %87 = sbr.rel (0) target = $region77
    $region76: #{tpu_custom_call.1} parent=1 // pred_region
      %89 = dma.done [#allocation8], 8192
    $region77: #{tpu_custom_call.1} parent=1 // pred_fallthru
      _
    %v90 = vld [vmem:[%s0] sm:$0xff]
    %v91 = vld [vmem:[%s0 + $0x8] sm:$0xff]
    %v92 = vld [vmem:[%s0 + $0x10] sm:$0xff]
    %v93 = vld [vmem:[%s0 + $0x18] sm:$0xf]
    %v94 = vld [vmem:[%s0 + $0x20] sm:$0xff]
    %v95 = vld [vmem:[%s0 + $0x28] sm:$0xff]
    %v96 = vld [vmem:[%s0 + $0x30] sm:$0xff]
    %v97 = vld [vmem:[%s0 + $0x38] sm:$0xf]
    %v98 = vld [vmem:[%s0 + $0x40] sm:$0xff]
    %v99 = vld [vmem:[%s0 + $0x48] sm:$0xff]
    %v100 = vld [vmem:[%s0 + $0x50] sm:$0xff]
    %v101 = vld [vmem:[%s0 + $0x58] sm:$0xf]
    %v102 = vld [vmem:[%s0 + $0x60] sm:$0xff]
    %v103 = vld [vmem:[%s0 + $0x68] sm:$0xff]
    %v104 = vld [vmem:[%s0 + $0x70] sm:$0xff]
    %v105 = vld [vmem:[%s0 + $0x78] sm:$0xf]
    %v106 = vld [vmem:[#allocation5] sm:$0xff]
    %v107 = vld [vmem:[#allocation5 + $0x8] sm:$0xff]
    %v108 = vld [vmem:[#allocation5 + $0x10] sm:$0xff]
    %v109 = vld [vmem:[#allocation5 + $0x18] sm:$0x3]
    %vm126 = vcmask 1046528
    %v127 = vrot.slane %v90, 1
    %v128 = vrot.slane %v91, 1
    %v129 = vsel %vm126, %v127, %v128
    %v130 = vrot.slane %v92, 1
    %v131 = vsel %vm126, %v128, %v130
    %v132 = vrot.slane %v93, 1
    %v133 = vsel %vm126, %v130, %v132
    %v134 = vrot.slane %v94, 1
    %v135 = vrot.slane %v95, 1
    %v136 = vsel %vm126, %v134, %v135
    %v137 = vrot.slane %v96, 1
    %v138 = vsel %vm126, %v135, %v137
    %v139 = vrot.slane %v97, 1
    %v140 = vsel %vm126, %v137, %v139
    %v141 = vrot.slane %v98, 1
    %v142 = vrot.slane %v99, 1
    %v143 = vsel %vm126, %v141, %v142
    %v144 = vrot.slane %v100, 1
    %v145 = vsel %vm126, %v142, %v144
    %v146 = vrot.slane %v101, 1
    %v147 = vsel %vm126, %v144, %v146
    %v148 = vrot.slane %v102, 1
    %v149 = vrot.slane %v103, 1
    %v150 = vsel %vm126, %v148, %v149
    %v151 = vrot.slane %v104, 1
    %v152 = vsel %vm126, %v149, %v151
    %v153 = vrot.slane %v105, 1
    %v154 = vsel %vm126, %v151, %v153
    %s155 = scalar_lea.vmem [#allocation5], 32
    %v156 = vld [vmem:[%s155] sm:$0xff]
    %v157 = vld [vmem:[%s155 + $0x8] sm:$0xff]
    %v158 = vld [vmem:[%s155 + $0x10] sm:$0xff]
    %v159 = vld [vmem:[%s155 + $0x18] sm:$0x3]
    %vm160 = vcmask 211968
    %v161 = vsel %vm160, %v129, 0
    %v163 = vsel %vm160, %v131, 0
    %v165 = vsel %vm160, %v133, 0
    %v167 = vsel %vm160, %v136, 0
    %v169 = vsel %vm160, %v138, 0
    %v171 = vsel %vm160, %v140, 0
    %v173 = vsel %vm160, %v143, 0
    %v175 = vsel %vm160, %v145, 0
    %v177 = vsel %vm160, %v147, 0
    %v179 = vsel %vm160, %v150, 0
    %v181 = vsel %vm160, %v152, 0
    %v183 = vsel %vm160, %v154, 0
    %vm185 = vcmask 1041408
    %v187 = vsel %vm185, %v159, 0
    %189 = vmatpush.msra.mxu0 0.0
    %190 = vmatpush.msra.mxu0 0.0
    %191 = vmatpush.msra.mxu0 0.0
    %192 = vmatpush.msra.mxu0 0.0
    %193 = vmatpush.msra.mxu0 0.0
    %194 = vmatpush.msra.mxu0 0.0
    %195 = vmatpush.msra.mxu0 0.0
    %196 = vmatpush.msra.mxu0 0.0
    %197 = vmatpush.msra.mxu0 0.0
    %198 = vmatpush.msra.mxu0 0.0
    %199 = vmatpush.msra.mxu0 0.0
    %200 = vmatpush.msra.mxu0 0.0
    %201 = vmatpush.msra.mxu0 %v187
    %202 = vmatpush.msra.mxu0 %v158
    %203 = vmatpush.msra.mxu0 %v157
    %204 = vmatpush.msra.mxu0 %v156
    %205 = vmatmul.f32.gmra.mxu0 %v161
    %v206 = vpop.f32.mrf.mxu0
    %v207 = vadd.f32 0.0, %v206
    %208 = vmatmul.f32.gmra.mxu0 %v163
    %v209 = vpop.f32.mrf.mxu0
    %v210 = vadd.f32 0.0, %v209
    %211 = vmatmul.f32.gmra.mxu0 %v165
    %v212 = vpop.f32.mrf.mxu0
    %v213 = vadd.f32 0.0, %v212
    %214 = vmatmul.f32.gmra.mxu0 %v167
    %v215 = vpop.f32.mrf.mxu0
    %v216 = vadd.f32 0.0, %v215
    %217 = vmatmul.f32.gmra.mxu0 %v169
    %v218 = vpop.f32.mrf.mxu0
    %v219 = vadd.f32 0.0, %v218
    %220 = vmatmul.f32.gmra.mxu0 %v171
    %v221 = vpop.f32.mrf.mxu0
    %v222 = vadd.f32 0.0, %v221
    %223 = vmatmul.f32.gmra.mxu0 %v173
    %v224 = vpop.f32.mrf.mxu0
    %v225 = vadd.f32 0.0, %v224
    %226 = vmatmul.f32.gmra.mxu0 %v175
    %v227 = vpop.f32.mrf.mxu0
    %v228 = vadd.f32 0.0, %v227
    %229 = vmatmul.f32.gmra.mxu0 %v177
    %v230 = vpop.f32.mrf.mxu0
    %v231 = vadd.f32 0.0, %v230
    %232 = vmatmul.f32.gmra.mxu0 %v179
    %v233 = vpop.f32.mrf.mxu0
    %v234 = vadd.f32 0.0, %v233
    %235 = vmatmul.f32.gmra.mxu0 %v181
    %v236 = vpop.f32.mrf.mxu0
    %v237 = vadd.f32 0.0, %v236
    %238 = vmatmul.f32.gmra.mxu0 %v183
    %v239 = vpop.f32.mrf.mxu0
    %v240 = vadd.f32 0.0, %v239
    %241 = vdwg.mxu0
    %v242 = vsel %vm160, %v90, 0
    %v244 = vsel %vm160, %v91, 0
    %v246 = vsel %vm160, %v92, 0
    %v248 = vsel %vm160, %v94, 0
    %v250 = vsel %vm160, %v95, 0
    %v252 = vsel %vm160, %v96, 0
    %v254 = vsel %vm160, %v98, 0
    %v256 = vsel %vm160, %v99, 0
    %v258 = vsel %vm160, %v100, 0
    %v260 = vsel %vm160, %v102, 0
    %v262 = vsel %vm160, %v103, 0
    %v264 = vsel %vm160, %v104, 0
    %v267 = vsel %vm185, %v109, 0
    %269 = vmatpush.msra.mxu0 0.0
    %270 = vmatpush.msra.mxu0 0.0
    %271 = vmatpush.msra.mxu0 0.0
    %272 = vmatpush.msra.mxu0 0.0
    %273 = vmatpush.msra.mxu0 0.0
    %274 = vmatpush.msra.mxu0 0.0
    %275 = vmatpush.msra.mxu0 0.0
    %276 = vmatpush.msra.mxu0 0.0
    %277 = vmatpush.msra.mxu0 0.0
    %278 = vmatpush.msra.mxu0 0.0
    %279 = vmatpush.msra.mxu0 0.0
    %280 = vmatpush.msra.mxu0 0.0
    %281 = vmatpush.msra.mxu0 %v267
    %282 = vmatpush.msra.mxu0 %v108
    %283 = vmatpush.msra.mxu0 %v107
    %284 = vmatpush.msra.mxu0 %v106
    %285 = vmatmul.f32.gmra.mxu0 %v242
    %v286 = vpop.f32.mrf.mxu0
    %v287 = vadd.f32 %v207, %v286
    %288 = vmatmul.f32.gmra.mxu0 %v244
    %v289 = vpop.f32.mrf.mxu0
    %v290 = vadd.f32 %v210, %v289
    %291 = vmatmul.f32.gmra.mxu0 %v246
    %v292 = vpop.f32.mrf.mxu0
    %v293 = vadd.f32 %v213, %v292
    %294 = vmatmul.f32.gmra.mxu0 %v248
    %v295 = vpop.f32.mrf.mxu0
    %v296 = vadd.f32 %v216, %v295
    %297 = vmatmul.f32.gmra.mxu0 %v250
    %v298 = vpop.f32.mrf.mxu0
    %v299 = vadd.f32 %v219, %v298
    %300 = vmatmul.f32.gmra.mxu0 %v252
    %v301 = vpop.f32.mrf.mxu0
    %v302 = vadd.f32 %v222, %v301
    %303 = vmatmul.f32.gmra.mxu0 %v254
    %v304 = vpop.f32.mrf.mxu0
    %v305 = vadd.f32 %v225, %v304
    %306 = vmatmul.f32.gmra.mxu0 %v256
    %v307 = vpop.f32.mrf.mxu0
    %v308 = vadd.f32 %v228, %v307
    %309 = vmatmul.f32.gmra.mxu0 %v258
    %v310 = vpop.f32.mrf.mxu0
    %v311 = vadd.f32 %v231, %v310
    %312 = vmatmul.f32.gmra.mxu0 %v260
    %v313 = vpop.f32.mrf.mxu0
    %v314 = vadd.f32 %v234, %v313
    %315 = vmatmul.f32.gmra.mxu0 %v262
    %v316 = vpop.f32.mrf.mxu0
    %v317 = vadd.f32 %v237, %v316
    %318 = vmatmul.f32.gmra.mxu0 %v264
    %v319 = vpop.f32.mrf.mxu0
    %v320 = vadd.f32 %v240, %v319
    %321 = vdwg.mxu0
    %vm322 = vcmask 1045504
    %v323 = vrot.slane %v90, 2
    %v324 = vrot.slane %v91, 2
    %v325 = vsel %vm322, %v323, %v324
    %v326 = vrot.slane %v92, 2
    %v327 = vsel %vm322, %v324, %v326
    %v328 = vrot.slane %v93, 2
    %v329 = vsel %vm322, %v326, %v328
    %v330 = vrot.slane %v94, 2
    %v331 = vrot.slane %v95, 2
    %v332 = vsel %vm322, %v330, %v331
    %v333 = vrot.slane %v96, 2
    %v334 = vsel %vm322, %v331, %v333
    %v335 = vrot.slane %v97, 2
    %v336 = vsel %vm322, %v333, %v335
    %v337 = vrot.slane %v98, 2
    %v338 = vrot.slane %v99, 2
    %v339 = vsel %vm322, %v337, %v338
    %v340 = vrot.slane %v100, 2
    %v341 = vsel %vm322, %v338, %v340
    %v342 = vrot.slane %v101, 2
    %v343 = vsel %vm322, %v340, %v342
    %v344 = vrot.slane %v102, 2
    %v345 = vrot.slane %v103, 2
    %v346 = vsel %vm322, %v344, %v345
    %v347 = vrot.slane %v104, 2
    %v348 = vsel %vm322, %v345, %v347
    %v349 = vrot.slane %v105, 2
    %v350 = vsel %vm322, %v347, %v349
    %s351 = scalar_lea.vmem [#allocation5], 64
    %v352 = vld [vmem:[%s351] sm:$0xff]
    %v353 = vld [vmem:[%s351 + $0x8] sm:$0xff]
    %v354 = vld [vmem:[%s351 + $0x10] sm:$0xff]
    %v355 = vld [vmem:[%s351 + $0x18] sm:$0x3]
    %v356 = vsel %vm160, %v325, 0
    %v358 = vsel %vm160, %v327, 0
    %v360 = vsel %vm160, %v329, 0
    %v362 = vsel %vm160, %v332, 0
    %v364 = vsel %vm160, %v334, 0
    %v366 = vsel %vm160, %v336, 0
    %v368 = vsel %vm160, %v339, 0
    %v370 = vsel %vm160, %v341, 0
    %v372 = vsel %vm160, %v343, 0
    %v374 = vsel %vm160, %v346, 0
    %v376 = vsel %vm160, %v348, 0
    %v378 = vsel %vm160, %v350, 0
    %v381 = vsel %vm185, %v355, 0
    %383 = vmatpush.msra.mxu0 0.0
    %384 = vmatpush.msra.mxu0 0.0
    %385 = vmatpush.msra.mxu0 0.0
    %386 = vmatpush.msra.mxu0 0.0
    %387 = vmatpush.msra.mxu0 0.0
    %388 = vmatpush.msra.mxu0 0.0
    %389 = vmatpush.msra.mxu0 0.0
    %390 = vmatpush.msra.mxu0 0.0
    %391 = vmatpush.msra.mxu0 0.0
    %392 = vmatpush.msra.mxu0 0.0
    %393 = vmatpush.msra.mxu0 0.0
    %394 = vmatpush.msra.mxu0 0.0
    %395 = vmatpush.msra.mxu0 %v381
    %396 = vmatpush.msra.mxu0 %v354
    %397 = vmatpush.msra.mxu0 %v353
    %398 = vmatpush.msra.mxu0 %v352
    %399 = vmatmul.f32.gmra.mxu0 %v356
    %v400 = vpop.f32.mrf.mxu0
    %v401 = vadd.f32 0.0, %v400
    %402 = vmatmul.f32.gmra.mxu0 %v358
    %v403 = vpop.f32.mrf.mxu0
    %v404 = vadd.f32 0.0, %v403
    %405 = vmatmul.f32.gmra.mxu0 %v360
    %v406 = vpop.f32.mrf.mxu0
    %v407 = vadd.f32 0.0, %v406
    %408 = vmatmul.f32.gmra.mxu0 %v362
    %v409 = vpop.f32.mrf.mxu0
    %v410 = vadd.f32 0.0, %v409
    %411 = vmatmul.f32.gmra.mxu0 %v364
    %v412 = vpop.f32.mrf.mxu0
    %v413 = vadd.f32 0.0, %v412
    %414 = vmatmul.f32.gmra.mxu0 %v366
    %v415 = vpop.f32.mrf.mxu0
    %v416 = vadd.f32 0.0, %v415
    %417 = vmatmul.f32.gmra.mxu0 %v368
    %v418 = vpop.f32.mrf.mxu0
    %v419 = vadd.f32 0.0, %v418
    %420 = vmatmul.f32.gmra.mxu0 %v370
    %v421 = vpop.f32.mrf.mxu0
    %v422 = vadd.f32 0.0, %v421
    %423 = vmatmul.f32.gmra.mxu0 %v372
    %v424 = vpop.f32.mrf.mxu0
    %v425 = vadd.f32 0.0, %v424
    %426 = vmatmul.f32.gmra.mxu0 %v374
    %v427 = vpop.f32.mrf.mxu0
    %v428 = vadd.f32 0.0, %v427
    %429 = vmatmul.f32.gmra.mxu0 %v376
    %v430 = vpop.f32.mrf.mxu0
    %v431 = vadd.f32 0.0, %v430
    %432 = vmatmul.f32.gmra.mxu0 %v378
    %v433 = vpop.f32.mrf.mxu0
    %v434 = vadd.f32 0.0, %v433
    %435 = vdwg.mxu0
    %v436 = vadd.f32 %v287, %v401
    %v437 = vadd.f32 %v290, %v404
    %v438 = vadd.f32 %v293, %v407
    %v439 = vadd.f32 %v296, %v410
    %v440 = vadd.f32 %v299, %v413
    %v441 = vadd.f32 %v302, %v416
    %v442 = vadd.f32 %v305, %v419
    %v443 = vadd.f32 %v308, %v422
    %v444 = vadd.f32 %v311, %v425
    %v445 = vadd.f32 %v314, %v428
    %v446 = vadd.f32 %v317, %v431
    %v447 = vadd.f32 %v320, %v434
    %vm448 = vcmask 1044480
    %v449 = vrot.slane %v90, 3
    %v450 = vrot.slane %v91, 3
    %v451 = vsel %vm448, %v449, %v450
    %v452 = vrot.slane %v92, 3
    %v453 = vsel %vm448, %v450, %v452
    %v454 = vrot.slane %v93, 3
    %v455 = vsel %vm448, %v452, %v454
    %v456 = vrot.slane %v94, 3
    %v457 = vrot.slane %v95, 3
    %v458 = vsel %vm448, %v456, %v457
    %v459 = vrot.slane %v96, 3
    %v460 = vsel %vm448, %v457, %v459
    %v461 = vrot.slane %v97, 3
    %v462 = vsel %vm448, %v459, %v461
    %v463 = vrot.slane %v98, 3
    %v464 = vrot.slane %v99, 3
    %v465 = vsel %vm448, %v463, %v464
    %v466 = vrot.slane %v100, 3
    %v467 = vsel %vm448, %v464, %v466
    %v468 = vrot.slane %v101, 3
    %v469 = vsel %vm448, %v466, %v468
    %v470 = vrot.slane %v102, 3
    %v471 = vrot.slane %v103, 3
    %v472 = vsel %vm448, %v470, %v471
    %v473 = vrot.slane %v104, 3
    %v474 = vsel %vm448, %v471, %v473
    %v475 = vrot.slane %v105, 3
    %v476 = vsel %vm448, %v473, %v475
    %s477 = scalar_lea.vmem [#allocation5], 96
    %v478 = vld [vmem:[%s477] sm:$0xff]
    %v479 = vld [vmem:[%s477 + $0x8] sm:$0xff]
    %v480 = vld [vmem:[%s477 + $0x10] sm:$0xff]
    %v481 = vld [vmem:[%s477 + $0x18] sm:$0x3]
    %v482 = vsel %vm160, %v451, 0
    %v484 = vsel %vm160, %v453, 0
    %v486 = vsel %vm160, %v455, 0
    %v488 = vsel %vm160, %v458, 0
    %v490 = vsel %vm160, %v460, 0
    %v492 = vsel %vm160, %v462, 0
    %v494 = vsel %vm160, %v465, 0
    %v496 = vsel %vm160, %v467, 0
    %v498 = vsel %vm160, %v469, 0
    %v500 = vsel %vm160, %v472, 0
    %v502 = vsel %vm160, %v474, 0
    %v504 = vsel %vm160, %v476, 0
    %v507 = vsel %vm185, %v481, 0
    %509 = vmatpush.msra.mxu0 0.0
    %510 = vmatpush.msra.mxu0 0.0
    %511 = vmatpush.msra.mxu0 0.0
    %512 = vmatpush.msra.mxu0 0.0
    %513 = vmatpush.msra.mxu0 0.0
    %514 = vmatpush.msra.mxu0 0.0
    %515 = vmatpush.msra.mxu0 0.0
    %516 = vmatpush.msra.mxu0 0.0
    %517 = vmatpush.msra.mxu0 0.0
    %518 = vmatpush.msra.mxu0 0.0
    %519 = vmatpush.msra.mxu0 0.0
    %520 = vmatpush.msra.mxu0 0.0
    %521 = vmatpush.msra.mxu0 %v507
    %522 = vmatpush.msra.mxu0 %v480
    %523 = vmatpush.msra.mxu0 %v479
    %524 = vmatpush.msra.mxu0 %v478
    %525 = vmatmul.f32.gmra.mxu0 %v482
    %v526 = vpop.f32.mrf.mxu0
    %v527 = vadd.f32 0.0, %v526
    %528 = vmatmul.f32.gmra.mxu0 %v484
    %v529 = vpop.f32.mrf.mxu0
    %v530 = vadd.f32 0.0, %v529
    %531 = vmatmul.f32.gmra.mxu0 %v486
    %v532 = vpop.f32.mrf.mxu0
    %v533 = vadd.f32 0.0, %v532
    %534 = vmatmul.f32.gmra.mxu0 %v488
    %v535 = vpop.f32.mrf.mxu0
    %v536 = vadd.f32 0.0, %v535
    %537 = vmatmul.f32.gmra.mxu0 %v490
    %v538 = vpop.f32.mrf.mxu0
    %v539 = vadd.f32 0.0, %v538
    %540 = vmatmul.f32.gmra.mxu0 %v492
    %v541 = vpop.f32.mrf.mxu0
    %v542 = vadd.f32 0.0, %v541
    %543 = vmatmul.f32.gmra.mxu0 %v494
    %v544 = vpop.f32.mrf.mxu0
    %v545 = vadd.f32 0.0, %v544
    %546 = vmatmul.f32.gmra.mxu0 %v496
    %v547 = vpop.f32.mrf.mxu0
    %v548 = vadd.f32 0.0, %v547
    %549 = vmatmul.f32.gmra.mxu0 %v498
    %v550 = vpop.f32.mrf.mxu0
    %v551 = vadd.f32 0.0, %v550
    %552 = vmatmul.f32.gmra.mxu0 %v500
    %v553 = vpop.f32.mrf.mxu0
    %v554 = vadd.f32 0.0, %v553
    %555 = vmatmul.f32.gmra.mxu0 %v502
    %v556 = vpop.f32.mrf.mxu0
    %v557 = vadd.f32 0.0, %v556
    %558 = vmatmul.f32.gmra.mxu0 %v504
    %v559 = vpop.f32.mrf.mxu0
    %v560 = vadd.f32 0.0, %v559
    %561 = vdwg.mxu0
    %v562 = vadd.f32 %v436, %v527
    %v563 = vadd.f32 %v437, %v530
    %v564 = vadd.f32 %v438, %v533
    %v565 = vadd.f32 %v439, %v536
    %v566 = vadd.f32 %v440, %v539
    %v567 = vadd.f32 %v441, %v542
    %v568 = vadd.f32 %v442, %v545
    %v569 = vadd.f32 %v443, %v548
    %v570 = vadd.f32 %v444, %v551
    %v571 = vadd.f32 %v445, %v554
    %v572 = vadd.f32 %v446, %v557
    %v573 = vadd.f32 %v447, %v560
    %vm574 = vcmask 1043456
    %v575 = vrot.slane %v90, 4
    %v576 = vrot.slane %v91, 4
    %v577 = vsel %vm574, %v575, %v576
    %v578 = vrot.slane %v92, 4
    %v579 = vsel %vm574, %v576, %v578
    %v580 = vrot.slane %v93, 4
    %v581 = vsel %vm574, %v578, %v580
    %v582 = vrot.slane %v94, 4
    %v583 = vrot.slane %v95, 4
    %v584 = vsel %vm574, %v582, %v583
    %v585 = vrot.slane %v96, 4
    %v586 = vsel %vm574, %v583, %v585
    %v587 = vrot.slane %v97, 4
    %v588 = vsel %vm574, %v585, %v587
    %v589 = vrot.slane %v98, 4
    %v590 = vrot.slane %v99, 4
    %v591 = vsel %vm574, %v589, %v590
    %v592 = vrot.slane %v100, 4
    %v593 = vsel %vm574, %v590, %v592
    %v594 = vrot.slane %v101, 4
    %v595 = vsel %vm574, %v592, %v594
    %v596 = vrot.slane %v102, 4
    %v597 = vrot.slane %v103, 4
    %v598 = vsel %vm574, %v596, %v597
    %v599 = vrot.slane %v104, 4
    %v600 = vsel %vm574, %v597, %v599
    %v601 = vrot.slane %v105, 4
    %v602 = vsel %vm574, %v599, %v601
    %s603 = scalar_lea.vmem [#allocation5], 128
    %v604 = vld [vmem:[%s603] sm:$0xff]
    %v605 = vld [vmem:[%s603 + $0x8] sm:$0xff]
    %v606 = vld [vmem:[%s603 + $0x10] sm:$0xff]
    %v607 = vld [vmem:[%s603 + $0x18] sm:$0x3]
    %v608 = vsel %vm160, %v577, 0
    %v610 = vsel %vm160, %v579, 0
    %v612 = vsel %vm160, %v581, 0
    %v614 = vsel %vm160, %v584, 0
    %v616 = vsel %vm160, %v586, 0
    %v618 = vsel %vm160, %v588, 0
    %v620 = vsel %vm160, %v591, 0
    %v622 = vsel %vm160, %v593, 0
    %v624 = vsel %vm160, %v595, 0
    %v626 = vsel %vm160, %v598, 0
    %v628 = vsel %vm160, %v600, 0
    %v630 = vsel %vm160, %v602, 0
    %v633 = vsel %vm185, %v607, 0
    %635 = vmatpush.msra.mxu0 0.0
    %636 = vmatpush.msra.mxu0 0.0
    %637 = vmatpush.msra.mxu0 0.0
    %638 = vmatpush.msra.mxu0 0.0
    %639 = vmatpush.msra.mxu0 0.0
    %640 = vmatpush.msra.mxu0 0.0
    %641 = vmatpush.msra.mxu0 0.0
    %642 = vmatpush.msra.mxu0 0.0
    %643 = vmatpush.msra.mxu0 0.0
    %644 = vmatpush.msra.mxu0 0.0
    %645 = vmatpush.msra.mxu0 0.0
    %646 = vmatpush.msra.mxu0 0.0
    %647 = vmatpush.msra.mxu0 %v633
    %648 = vmatpush.msra.mxu0 %v606
    %649 = vmatpush.msra.mxu0 %v605
    %650 = vmatpush.msra.mxu0 %v604
    %651 = vmatmul.f32.gmra.mxu0 %v608
    %v652 = vpop.f32.mrf.mxu0
    %v653 = vadd.f32 0.0, %v652
    %654 = vmatmul.f32.gmra.mxu0 %v610
    %v655 = vpop.f32.mrf.mxu0
    %v656 = vadd.f32 0.0, %v655
    %657 = vmatmul.f32.gmra.mxu0 %v612
    %v658 = vpop.f32.mrf.mxu0
    %v659 = vadd.f32 0.0, %v658
    %660 = vmatmul.f32.gmra.mxu0 %v614
    %v661 = vpop.f32.mrf.mxu0
    %v662 = vadd.f32 0.0, %v661
    %663 = vmatmul.f32.gmra.mxu0 %v616
    %v664 = vpop.f32.mrf.mxu0
    %v665 = vadd.f32 0.0, %v664
    %666 = vmatmul.f32.gmra.mxu0 %v618
    %v667 = vpop.f32.mrf.mxu0
    %v668 = vadd.f32 0.0, %v667
    %669 = vmatmul.f32.gmra.mxu0 %v620
    %v670 = vpop.f32.mrf.mxu0
    %v671 = vadd.f32 0.0, %v670
    %672 = vmatmul.f32.gmra.mxu0 %v622
    %v673 = vpop.f32.mrf.mxu0
    %v674 = vadd.f32 0.0, %v673
    %675 = vmatmul.f32.gmra.mxu0 %v624
    %v676 = vpop.f32.mrf.mxu0
    %v677 = vadd.f32 0.0, %v676
    %678 = vmatmul.f32.gmra.mxu0 %v626
    %v679 = vpop.f32.mrf.mxu0
    %v680 = vadd.f32 0.0, %v679
    %681 = vmatmul.f32.gmra.mxu0 %v628
    %v682 = vpop.f32.mrf.mxu0
    %v683 = vadd.f32 0.0, %v682
    %684 = vmatmul.f32.gmra.mxu0 %v630
    %v685 = vpop.f32.mrf.mxu0
    %v686 = vadd.f32 0.0, %v685
    %687 = vdwg.mxu0
    %v688 = vadd.f32 %v562, %v653
    %v689 = vadd.f32 %v563, %v656
    %v690 = vadd.f32 %v564, %v659
    %v691 = vadd.f32 %v565, %v662
    %v692 = vadd.f32 %v566, %v665
    %v693 = vadd.f32 %v567, %v668
    %v694 = vadd.f32 %v568, %v671
    %v695 = vadd.f32 %v569, %v674
    %v696 = vadd.f32 %v570, %v677
    %v697 = vadd.f32 %v571, %v680
    %v698 = vadd.f32 %v572, %v683
    %v699 = vadd.f32 %v573, %v686
    %v700 = vld [vmem:[%s2] sm:$0x1]
    %v702 = vperm.slane %v700, 0
    %v704 = vadd.f32 %v688, %v702
    %v705 = vadd.f32 %v689, %v702
    %v706 = vadd.f32 %v690, %v702
    %v707 = vadd.f32 %v691, %v702
    %v708 = vadd.f32 %v692, %v702
    %v709 = vadd.f32 %v693, %v702
    %v710 = vadd.f32 %v694, %v702
    %v711 = vadd.f32 %v695, %v702
    %v712 = vadd.f32 %v696, %v702
    %v713 = vadd.f32 %v697, %v702
    %v714 = vadd.f32 %v698, %v702
    %v715 = vadd.f32 %v699, %v702
    %v716 = vmax.f32 %v704, 0.0
    %v717 = vmax.f32 %v705, 0.0
    %v718 = vmax.f32 %v706, 0.0
    %v719 = vmax.f32 %v707, 0.0
    %v720 = vmax.f32 %v708, 0.0
    %v721 = vmax.f32 %v709, 0.0
    %v722 = vmax.f32 %v710, 0.0
    %v723 = vmax.f32 %v711, 0.0
    %v724 = vmax.f32 %v712, 0.0
    %v725 = vmax.f32 %v713, 0.0
    %v726 = vmax.f32 %v714, 0.0
    %v727 = vmax.f32 %v715, 0.0
    %vm728 = vcmask 523264
    %729 = vst.msk [vmem:[#allocation2] sm:$0xff] %vm728, %v716
    %730 = vst.msk [vmem:[#allocation2 + $0x8] sm:$0xff] %vm728, %v717
    %731 = vst.msk [vmem:[#allocation2 + $0x10] sm:$0xff] %vm728, %v718
    %732 = vst.msk [vmem:[#allocation2 + $0x18] sm:$0xff] %vm728, %v719
    %733 = vst.msk [vmem:[#allocation2 + $0x20] sm:$0xff] %vm728, %v720
    %734 = vst.msk [vmem:[#allocation2 + $0x28] sm:$0xff] %vm728, %v721
    %735 = vst.msk [vmem:[#allocation2 + $0x30] sm:$0xff] %vm728, %v722
    %736 = vst.msk [vmem:[#allocation2 + $0x38] sm:$0xff] %vm728, %v723
    %737 = vst.msk [vmem:[#allocation2 + $0x40] sm:$0xff] %vm728, %v724
    %738 = vst.msk [vmem:[#allocation2 + $0x48] sm:$0xff] %vm728, %v725
    %739 = vst.msk [vmem:[#allocation2 + $0x50] sm:$0xff] %vm728, %v726
    %740 = vst.msk [vmem:[#allocation2 + $0x58] sm:$0xff] %vm728, %v727
    %v741 = vld [vmem:[#allocation2] ss:$2 sm:$0xff]
    %s742 = scalar_lea.vmem [#allocation2], 16
    %v743 = vld [vmem:[%s742] ss:$2 sm:$0xff]
    %s744 = scalar_lea.vmem [#allocation2], 32
    %v745 = vld [vmem:[%s744] ss:$2 sm:$0xff]
    %s746 = scalar_lea.vmem [#allocation2], 48
    %v747 = vld [vmem:[%s746] ss:$2 sm:$0xff]
    %s748 = scalar_lea.vmem [#allocation2], 64
    %v749 = vld [vmem:[%s748] ss:$2 sm:$0xff]
    %s750 = scalar_lea.vmem [#allocation2], 80
    %v751 = vld [vmem:[%s750] ss:$2 sm:$0xff]
    %s752 = scalar_lea.vmem [#allocation2], 1
    %v753 = vld [vmem:[%s752] ss:$2 sm:$0xff]
    %s754 = scalar_lea.vmem [#allocation2], 17
    %v755 = vld [vmem:[%s754] ss:$2 sm:$0xff]
    %s756 = scalar_lea.vmem [#allocation2], 33
    %v757 = vld [vmem:[%s756] ss:$2 sm:$0xff]
    %s758 = scalar_lea.vmem [#allocation2], 49
    %v759 = vld [vmem:[%s758] ss:$2 sm:$0xff]
    %s760 = scalar_lea.vmem [#allocation2], 65
    %v761 = vld [vmem:[%s760] ss:$2 sm:$0xff]
    %s762 = scalar_lea.vmem [#allocation2], 81
    %v763 = vld [vmem:[%s762] ss:$2 sm:$0xff]
    %v764 = vmax.f32 %v741, %v753
    %v765 = vmax.f32 %v743, %v755
    %v766 = vmax.f32 %v745, %v757
    %v767 = vmax.f32 %v747, %v759
    %v768 = vmax.f32 %v749, %v761
    %v769 = vmax.f32 %v751, %v763
    %v770 = vld [vmem:[%s3] sm:$0x1]
    %v772 = vperm.slane %v770, 0
    %v774 = vmul.f32 %v764, %v772
    %v775 = vmul.f32 %v765, %v772
    %v776 = vmul.f32 %v766, %v772
    %v777 = vmul.f32 %v767, %v772
    %v778 = vmul.f32 %v768, %v772
    %v779 = vmul.f32 %v769, %v772
    %v780 = vld [vmem:[%s4] sm:$0x1]
    %v782 = vperm.slane %v780, 0
    %v784 = vadd.f32 %v774, %v782
    %v785 = vadd.f32 %v775, %v782
    %v786 = vadd.f32 %v776, %v782
    %v787 = vadd.f32 %v777, %v782
    %v788 = vadd.f32 %v778, %v782
    %v789 = vadd.f32 %v779, %v782
    %v796 = vrot.slane %v784, 4
    %v797 = vrot.slane %v785, 4
    %v798 = vrot.slane %v786, 4
    %v799 = vrot.slane %v787, 4
    %v800 = vrot.slane %v788, 4
    %v801 = vrot.slane %v789, 4
    %v802 = vld [vmem:[%s5] sm:$0xff]
    %v803 = vld [vmem:[%s5 + $0x8] sm:$0xff]
    %v804 = vld [vmem:[%s5 + $0x10] sm:$0xff]
    %v805 = vld [vmem:[%s5 + $0x18] sm:$0xff]
    %v806 = vld [vmem:[%s5 + $0x20] sm:$0xff]
    %v807 = vld [vmem:[%s5 + $0x28] sm:$0xff]
    %v808 = vld [vmem:[%s5 + $0x30] sm:$0xff]
    %v809 = vld [vmem:[%s5 + $0x38] sm:$0xff]
    %vm810 = vcmask 1042432
    %vm811 = vcmask 1046532
    %vm812 = vmor %vm810, %vm811
    %v813 = vrot.slane %v784, 5
    %v814 = vrot.slane %v813, 4
    %v815 = vrot.slane %v796, 5
    %v816 = vsel %vm812, %v814, %v815
    %v817 = vrot.slane %v815, 4
    %v818 = vrot.slane %v785, 5
    %v819 = vsel %vm812, %v817, %v818
    %v820 = vrot.slane %v797, 5
    %v821 = vrot.slane %v820, 4
    %v822 = vrot.slane %v786, 5
    %v823 = vsel %vm812, %v821, %v822
    %v824 = vrot.slane %v822, 4
    %v825 = vrot.slane %v798, 5
    %v826 = vsel %vm812, %v824, %v825
    %v827 = vrot.slane %v787, 5
    %v828 = vrot.slane %v827, 4
    %v829 = vrot.slane %v799, 5
    %v830 = vsel %vm812, %v828, %v829
    %v831 = vrot.slane %v829, 4
    %v832 = vrot.slane %v788, 5
    %v833 = vsel %vm812, %v831, %v832
    %v834 = vrot.slane %v800, 5
    %v835 = vrot.slane %v834, 4
    %v836 = vrot.slane %v789, 5
    %v837 = vsel %vm812, %v835, %v836
    %v838 = vrot.slane %v836, 4
    %v839 = vrot.slane %v801, 5
    %v840 = vsel %vm812, %v838, %v839
    %s841 = scalar_lea.vmem %s5, 64
    %v842 = vld [vmem:[%s841] sm:$0xff]
    %v843 = vld [vmem:[%s841 + $0x8] sm:$0xff]
    %v844 = vld [vmem:[%s841 + $0x10] sm:$0xff]
    %v845 = vld [vmem:[%s841 + $0x18] sm:$0xff]
    %v846 = vld [vmem:[%s841 + $0x20] sm:$0xff]
    %v847 = vld [vmem:[%s841 + $0x28] sm:$0xff]
    %v848 = vld [vmem:[%s841 + $0x30] sm:$0xff]
    %v849 = vld [vmem:[%s841 + $0x38] sm:$0xff]
    %850 = vst [vmem:[#allocation1] ss:$2 sm:$0xff] %v816
    %s851 = scalar_lea.vmem [#allocation1], 1
    %852 = vst [vmem:[%s851] ss:$2 sm:$0xff] %v819
    %s853 = scalar_lea.vmem [#allocation1], 16
    %854 = vst [vmem:[%s853] ss:$2 sm:$0xff] %v823
    %s855 = scalar_lea.vmem [#allocation1], 17
    %856 = vst [vmem:[%s855] ss:$2 sm:$0xff] %v826
    %s857 = scalar_lea.vmem [#allocation1], 32
    %858 = vst [vmem:[%s857] ss:$2 sm:$0xff] %v830
    %s859 = scalar_lea.vmem [#allocation1], 33
    %860 = vst [vmem:[%s859] ss:$2 sm:$0xff] %v833
    %s861 = scalar_lea.vmem [#allocation1], 48
    %862 = vst [vmem:[%s861] ss:$2 sm:$0xff] %v837
    %s863 = scalar_lea.vmem [#allocation1], 49
    %864 = vst [vmem:[%s863] ss:$2 sm:$0xff] %v840
    %v865 = vld.sshfl [vmem:[#allocation1] sm:$0xff pattern:$0x75316420]
    %v866 = vld.sshfl [vmem:[#allocation1 + $0x10] sm:$0xff pattern:$0x75316420]
    %v867 = vld.sshfl [vmem:[#allocation1 + $0x20] sm:$0xff pattern:$0x75316420]
    %v868 = vld.sshfl [vmem:[#allocation1 + $0x30] sm:$0xff pattern:$0x75316420]
    %v869 = vsel %vm728, %v865, 0
    %v871 = vsel %vm728, %v866, 0
    %v873 = vsel %vm728, %v867, 0
    %v875 = vsel %vm728, %v868, 0
    %877 = vmatpush.msra.mxu0 0.0
    %878 = vmatpush.msra.mxu0 0.0
    %879 = vmatpush.msra.mxu0 0.0
    %880 = vmatpush.msra.mxu0 0.0
    %881 = vmatpush.msra.mxu0 0.0
    %882 = vmatpush.msra.mxu0 0.0
    %883 = vmatpush.msra.mxu0 0.0
    %884 = vmatpush.msra.mxu0 0.0
    %885 = vmatpush.msra.mxu0 %v849
    %886 = vmatpush.msra.mxu0 %v848
    %887 = vmatpush.msra.mxu0 %v847
    %888 = vmatpush.msra.mxu0 %v846
    %889 = vmatpush.msra.mxu0 %v845
    %890 = vmatpush.msra.mxu0 %v844
    %891 = vmatpush.msra.mxu0 %v843
    %892 = vmatpush.msra.mxu0 %v842
    %893 = vmatmul.f32.gmra.mxu0 %v869
    %v894 = vpop.f32.mrf.mxu0
    %v895 = vadd.f32 0.0, %v894
    %896 = vmatmul.f32.gmra.mxu0 %v871
    %v897 = vpop.f32.mrf.mxu0
    %v898 = vadd.f32 0.0, %v897
    %899 = vmatmul.f32.gmra.mxu0 %v873
    %v900 = vpop.f32.mrf.mxu0
    %v901 = vadd.f32 0.0, %v900
    %902 = vmatmul.f32.gmra.mxu0 %v875
    %v903 = vpop.f32.mrf.mxu0
    %v904 = vadd.f32 0.0, %v903
    %905 = vdwg.mxu0
    %906 = vst [vmem:[#allocation1] ss:$2 sm:$0xff] %v784
    %s907 = scalar_lea.vmem [#allocation1], 1
    %908 = vst [vmem:[%s907] ss:$2 sm:$0xff] %v796
    %s909 = scalar_lea.vmem [#allocation1], 16
    %910 = vst [vmem:[%s909] ss:$2 sm:$0xff] %v797
    %s911 = scalar_lea.vmem [#allocation1], 17
    %912 = vst [vmem:[%s911] ss:$2 sm:$0xff] %v786
    %s913 = scalar_lea.vmem [#allocation1], 32
    %914 = vst [vmem:[%s913] ss:$2 sm:$0xff] %v787
    %s915 = scalar_lea.vmem [#allocation1], 33
    %916 = vst [vmem:[%s915] ss:$2 sm:$0xff] %v799
    %s917 = scalar_lea.vmem [#allocation1], 48
    %918 = vst [vmem:[%s917] ss:$2 sm:$0xff] %v800
    %s919 = scalar_lea.vmem [#allocation1], 49
    %920 = vst [vmem:[%s919] ss:$2 sm:$0xff] %v789
    %v921 = vld.sshfl [vmem:[#allocation1] sm:$0xff pattern:$0x75316420]
    %v922 = vld.sshfl [vmem:[#allocation1 + $0x10] sm:$0xff pattern:$0x75316420]
    %v923 = vld.sshfl [vmem:[#allocation1 + $0x20] sm:$0xff pattern:$0x75316420]
    %v924 = vld.sshfl [vmem:[#allocation1 + $0x30] sm:$0xff pattern:$0x75316420]
    %v925 = vsel %vm728, %v921, 0
    %v927 = vsel %vm728, %v922, 0
    %v929 = vsel %vm728, %v923, 0
    %v931 = vsel %vm728, %v924, 0
    %933 = vmatpush.msra.mxu0 0.0
    %934 = vmatpush.msra.mxu0 0.0
    %935 = vmatpush.msra.mxu0 0.0
    %936 = vmatpush.msra.mxu0 0.0
    %937 = vmatpush.msra.mxu0 0.0
    %938 = vmatpush.msra.mxu0 0.0
    %939 = vmatpush.msra.mxu0 0.0
    %940 = vmatpush.msra.mxu0 0.0
    %941 = vmatpush.msra.mxu0 %v809
    %942 = vmatpush.msra.mxu0 %v808
    %943 = vmatpush.msra.mxu0 %v807
    %944 = vmatpush.msra.mxu0 %v806
    %945 = vmatpush.msra.mxu0 %v805
    %946 = vmatpush.msra.mxu0 %v804
    %947 = vmatpush.msra.mxu0 %v803
    %948 = vmatpush.msra.mxu0 %v802
    %949 = vmatmul.f32.gmra.mxu0 %v925
    %v950 = vpop.f32.mrf.mxu0
    %v951 = vadd.f32 %v895, %v950
    %952 = vmatmul.f32.gmra.mxu0 %v927
    %v953 = vpop.f32.mrf.mxu0
    %v954 = vadd.f32 %v898, %v953
    %955 = vmatmul.f32.gmra.mxu0 %v929
    %v956 = vpop.f32.mrf.mxu0
    %v957 = vadd.f32 %v901, %v956
    %958 = vmatmul.f32.gmra.mxu0 %v931
    %v959 = vpop.f32.mrf.mxu0
    %v960 = vadd.f32 %v904, %v959
    %961 = vdwg.mxu0
    %vm962 = vcmask 1045508
    %vm963 = vmor %vm185, %vm962
    %v964 = vrot.slane %v784, 6
    %v965 = vrot.slane %v964, 4
    %v966 = vrot.slane %v796, 6
    %v967 = vsel %vm963, %v965, %v966
    %v968 = vrot.slane %v966, 4
    %v969 = vrot.slane %v785, 6
    %v970 = vsel %vm963, %v968, %v969
    %v971 = vrot.slane %v797, 6
    %v972 = vrot.slane %v971, 4
    %v973 = vrot.slane %v786, 6
    %v974 = vsel %vm963, %v972, %v973
    %v975 = vrot.slane %v973, 4
    %v976 = vrot.slane %v798, 6
    %v977 = vsel %vm963, %v975, %v976
    %v978 = vrot.slane %v787, 6
    %v979 = vrot.slane %v978, 4
    %v980 = vrot.slane %v799, 6
    %v981 = vsel %vm963, %v979, %v980
    %v982 = vrot.slane %v980, 4
    %v983 = vrot.slane %v788, 6
    %v984 = vsel %vm963, %v982, %v983
    %v985 = vrot.slane %v800, 6
    %v986 = vrot.slane %v985, 4
    %v987 = vrot.slane %v789, 6
    %v988 = vsel %vm963, %v986, %v987
    %v989 = vrot.slane %v987, 4
    %v990 = vrot.slane %v801, 6
    %v991 = vsel %vm963, %v989, %v990
    %s992 = scalar_lea.vmem %s5, 128
    %v993 = vld [vmem:[%s992] sm:$0xff]
    %v994 = vld [vmem:[%s992 + $0x8] sm:$0xff]
    %v995 = vld [vmem:[%s992 + $0x10] sm:$0xff]
    %v996 = vld [vmem:[%s992 + $0x18] sm:$0xff]
    %v997 = vld [vmem:[%s992 + $0x20] sm:$0xff]
    %v998 = vld [vmem:[%s992 + $0x28] sm:$0xff]
    %v999 = vld [vmem:[%s992 + $0x30] sm:$0xff]
    %v1000 = vld [vmem:[%s992 + $0x38] sm:$0xff]
    %1001 = vst [vmem:[#allocation1] ss:$2 sm:$0xff] %v967
    %s1002 = scalar_lea.vmem [#allocation1], 1
    %1003 = vst [vmem:[%s1002] ss:$2 sm:$0xff] %v970
    %s1004 = scalar_lea.vmem [#allocation1], 16
    %1005 = vst [vmem:[%s1004] ss:$2 sm:$0xff] %v974
    %s1006 = scalar_lea.vmem [#allocation1], 17
    %1007 = vst [vmem:[%s1006] ss:$2 sm:$0xff] %v977
    %s1008 = scalar_lea.vmem [#allocation1], 32
    %1009 = vst [vmem:[%s1008] ss:$2 sm:$0xff] %v981
    %s1010 = scalar_lea.vmem [#allocation1], 33
    %1011 = vst [vmem:[%s1010] ss:$2 sm:$0xff] %v984
    %s1012 = scalar_lea.vmem [#allocation1], 48
    %1013 = vst [vmem:[%s1012] ss:$2 sm:$0xff] %v988
    %s1014 = scalar_lea.vmem [#allocation1], 49
    %1015 = vst [vmem:[%s1014] ss:$2 sm:$0xff] %v991
    %v1016 = vld.sshfl [vmem:[#allocation1] sm:$0xff pattern:$0x75316420]
    %v1017 = vld.sshfl [vmem:[#allocation1 + $0x10] sm:$0xff pattern:$0x75316420]
    %v1018 = vld.sshfl [vmem:[#allocation1 + $0x20] sm:$0xff pattern:$0x75316420]
    %v1019 = vld.sshfl [vmem:[#allocation1 + $0x30] sm:$0xff pattern:$0x75316420]
    %v1020 = vsel %vm728, %v1016, 0
    %v1022 = vsel %vm728, %v1017, 0
    %v1024 = vsel %vm728, %v1018, 0
    %v1026 = vsel %vm728, %v1019, 0
    %1028 = vmatpush.msra.mxu0 0.0
    %1029 = vmatpush.msra.mxu0 0.0
    %1030 = vmatpush.msra.mxu0 0.0
    %1031 = vmatpush.msra.mxu0 0.0
    %1032 = vmatpush.msra.mxu0 0.0
    %1033 = vmatpush.msra.mxu0 0.0
    %1034 = vmatpush.msra.mxu0 0.0
    %1035 = vmatpush.msra.mxu0 0.0
    %1036 = vmatpush.msra.mxu0 %v1000
    %1037 = vmatpush.msra.mxu0 %v999
    %1038 = vmatpush.msra.mxu0 %v998
    %1039 = vmatpush.msra.mxu0 %v997
    %1040 = vmatpush.msra.mxu0 %v996
    %1041 = vmatpush.msra.mxu0 %v995
    %1042 = vmatpush.msra.mxu0 %v994
    %1043 = vmatpush.msra.mxu0 %v993
    %1044 = vmatmul.f32.gmra.mxu0 %v1020
    %v1045 = vpop.f32.mrf.mxu0
    %v1046 = vadd.f32 0.0, %v1045
    %1047 = vmatmul.f32.gmra.mxu0 %v1022
    %v1048 = vpop.f32.mrf.mxu0
    %v1049 = vadd.f32 0.0, %v1048
    %1050 = vmatmul.f32.gmra.mxu0 %v1024
    %v1051 = vpop.f32.mrf.mxu0
    %v1052 = vadd.f32 0.0, %v1051
    %1053 = vmatmul.f32.gmra.mxu0 %v1026
    %v1054 = vpop.f32.mrf.mxu0
    %v1055 = vadd.f32 0.0, %v1054
    %1056 = vdwg.mxu0
    %v1057 = vadd.f32 %v951, %v1046
    %v1058 = vadd.f32 %v954, %v1049
    %v1059 = vadd.f32 %v957, %v1052
    %v1060 = vadd.f32 %v960, %v1055
    %vm1061 = vcmask 1040384
    %vm1062 = vcmask 1044484
    %vm1063 = vmor %vm1061, %vm1062
    %v1064 = vrot.slane %v784, 7
    %v1065 = vrot.slane %v1064, 4
    %v1066 = vrot.slane %v796, 7
    %v1067 = vsel %vm1063, %v1065, %v1066
    %v1068 = vrot.slane %v1066, 4
    %v1069 = vrot.slane %v785, 7
    %v1070 = vsel %vm1063, %v1068, %v1069
    %v1071 = vrot.slane %v797, 7
    %v1072 = vrot.slane %v1071, 4
    %v1073 = vrot.slane %v786, 7
    %v1074 = vsel %vm1063, %v1072, %v1073
    %v1075 = vrot.slane %v1073, 4
    %v1076 = vrot.slane %v798, 7
    %v1077 = vsel %vm1063, %v1075, %v1076
    %v1078 = vrot.slane %v787, 7
    %v1079 = vrot.slane %v1078, 4
    %v1080 = vrot.slane %v799, 7
    %v1081 = vsel %vm1063, %v1079, %v1080
    %v1082 = vrot.slane %v1080, 4
    %v1083 = vrot.slane %v788, 7
    %v1084 = vsel %vm1063, %v1082, %v1083
    %v1085 = vrot.slane %v800, 7
    %v1086 = vrot.slane %v1085, 4
    %v1087 = vrot.slane %v789, 7
    %v1088 = vsel %vm1063, %v1086, %v1087
    %v1089 = vrot.slane %v1087, 4
    %v1090 = vrot.slane %v801, 7
    %v1091 = vsel %vm1063, %v1089, %v1090
    %s1092 = scalar_lea.vmem %s5, 192
    %v1093 = vld [vmem:[%s1092] sm:$0xff]
    %v1094 = vld [vmem:[%s1092 + $0x8] sm:$0xff]
    %v1095 = vld [vmem:[%s1092 + $0x10] sm:$0xff]
    %v1096 = vld [vmem:[%s1092 + $0x18] sm:$0xff]
    %v1097 = vld [vmem:[%s1092 + $0x20] sm:$0xff]
    %v1098 = vld [vmem:[%s1092 + $0x28] sm:$0xff]
    %v1099 = vld [vmem:[%s1092 + $0x30] sm:$0xff]
    %v1100 = vld [vmem:[%s1092 + $0x38] sm:$0xff]
    %1101 = vst [vmem:[#allocation1] ss:$2 sm:$0xff] %v1067
    %s1102 = scalar_lea.vmem [#allocation1], 1
    %1103 = vst [vmem:[%s1102] ss:$2 sm:$0xff] %v1070
    %s1104 = scalar_lea.vmem [#allocation1], 16
    %1105 = vst [vmem:[%s1104] ss:$2 sm:$0xff] %v1074
    %s1106 = scalar_lea.vmem [#allocation1], 17
    %1107 = vst [vmem:[%s1106] ss:$2 sm:$0xff] %v1077
    %s1108 = scalar_lea.vmem [#allocation1], 32
    %1109 = vst [vmem:[%s1108] ss:$2 sm:$0xff] %v1081
    %s1110 = scalar_lea.vmem [#allocation1], 33
    %1111 = vst [vmem:[%s1110] ss:$2 sm:$0xff] %v1084
    %s1112 = scalar_lea.vmem [#allocation1], 48
    %1113 = vst [vmem:[%s1112] ss:$2 sm:$0xff] %v1088
    %s1114 = scalar_lea.vmem [#allocation1], 49
    %1115 = vst [vmem:[%s1114] ss:$2 sm:$0xff] %v1091
    %v1116 = vld.sshfl [vmem:[#allocation1] sm:$0xff pattern:$0x75316420]
    %v1117 = vld.sshfl [vmem:[#allocation1 + $0x10] sm:$0xff pattern:$0x75316420]
    %v1118 = vld.sshfl [vmem:[#allocation1 + $0x20] sm:$0xff pattern:$0x75316420]
    %v1119 = vld.sshfl [vmem:[#allocation1 + $0x30] sm:$0xff pattern:$0x75316420]
    %v1120 = vsel %vm728, %v1116, 0
    %v1122 = vsel %vm728, %v1117, 0
    %v1124 = vsel %vm728, %v1118, 0
    %v1126 = vsel %vm728, %v1119, 0
    %1128 = vmatpush.msra.mxu0 0.0
    %1129 = vmatpush.msra.mxu0 0.0
    %1130 = vmatpush.msra.mxu0 0.0
    %1131 = vmatpush.msra.mxu0 0.0
    %1132 = vmatpush.msra.mxu0 0.0
    %1133 = vmatpush.msra.mxu0 0.0
    %1134 = vmatpush.msra.mxu0 0.0
    %1135 = vmatpush.msra.mxu0 0.0
    %1136 = vmatpush.msra.mxu0 %v1100
    %1137 = vmatpush.msra.mxu0 %v1099
    %1138 = vmatpush.msra.mxu0 %v1098
    %1139 = vmatpush.msra.mxu0 %v1097
    %1140 = vmatpush.msra.mxu0 %v1096
    %1141 = vmatpush.msra.mxu0 %v1095
    %1142 = vmatpush.msra.mxu0 %v1094
    %1143 = vmatpush.msra.mxu0 %v1093
    %1144 = vmatmul.f32.gmra.mxu0 %v1120
    %v1145 = vpop.f32.mrf.mxu0
    %v1146 = vadd.f32 0.0, %v1145
    %1147 = vmatmul.f32.gmra.mxu0 %v1122
    %v1148 = vpop.f32.mrf.mxu0
    %v1149 = vadd.f32 0.0, %v1148
    %1150 = vmatmul.f32.gmra.mxu0 %v1124
    %v1151 = vpop.f32.mrf.mxu0
    %v1152 = vadd.f32 0.0, %v1151
    %1153 = vmatmul.f32.gmra.mxu0 %v1126
    %v1154 = vpop.f32.mrf.mxu0
    %v1155 = vadd.f32 0.0, %v1154
    %1156 = vdwg.mxu0
    %v1157 = vadd.f32 %v1057, %v1146
    %v1158 = vadd.f32 %v1058, %v1149
    %v1159 = vadd.f32 %v1059, %v1152
    %v1160 = vadd.f32 %v1060, %v1155
    %s1161 = scalar_lea.vmem %s5, 256
    %v1162 = vld [vmem:[%s1161] sm:$0xff]
    %v1163 = vld [vmem:[%s1161 + $0x8] sm:$0xff]
    %v1164 = vld [vmem:[%s1161 + $0x10] sm:$0xff]
    %v1165 = vld [vmem:[%s1161 + $0x18] sm:$0xff]
    %v1166 = vld [vmem:[%s1161 + $0x20] sm:$0xff]
    %v1167 = vld [vmem:[%s1161 + $0x28] sm:$0xff]
    %v1168 = vld [vmem:[%s1161 + $0x30] sm:$0xff]
    %v1169 = vld [vmem:[%s1161 + $0x38] sm:$0xff]
    %1170 = vst [vmem:[#allocation1] ss:$2 sm:$0xff] %v796
    %s1171 = scalar_lea.vmem [#allocation1], 1
    %1172 = vst [vmem:[%s1171] ss:$2 sm:$0xff] %v785
    %s1173 = scalar_lea.vmem [#allocation1], 16
    %1174 = vst [vmem:[%s1173] ss:$2 sm:$0xff] %v786
    %s1175 = scalar_lea.vmem [#allocation1], 17
    %1176 = vst [vmem:[%s1175] ss:$2 sm:$0xff] %v798
    %s1177 = scalar_lea.vmem [#allocation1], 32
    %1178 = vst [vmem:[%s1177] ss:$2 sm:$0xff] %v799
    %s1179 = scalar_lea.vmem [#allocation1], 33
    %1180 = vst [vmem:[%s1179] ss:$2 sm:$0xff] %v788
    %s1181 = scalar_lea.vmem [#allocation1], 48
    %1182 = vst [vmem:[%s1181] ss:$2 sm:$0xff] %v789
    %s1183 = scalar_lea.vmem [#allocation1], 49
    %1184 = vst [vmem:[%s1183] ss:$2 sm:$0xff] %v801
    %v1185 = vld.sshfl [vmem:[#allocation1] sm:$0xff pattern:$0x75316420]
    %v1186 = vld.sshfl [vmem:[#allocation1 + $0x10] sm:$0xff pattern:$0x75316420]
    %v1187 = vld.sshfl [vmem:[#allocation1 + $0x20] sm:$0xff pattern:$0x75316420]
    %v1188 = vld.sshfl [vmem:[#allocation1 + $0x30] sm:$0xff pattern:$0x75316420]
    %v1189 = vsel %vm728, %v1185, 0
    %v1191 = vsel %vm728, %v1186, 0
    %v1193 = vsel %vm728, %v1187, 0
    %v1195 = vsel %vm728, %v1188, 0
    %1197 = vmatpush.msra.mxu0 0.0
    %1198 = vmatpush.msra.mxu0 0.0
    %1199 = vmatpush.msra.mxu0 0.0
    %1200 = vmatpush.msra.mxu0 0.0
    %1201 = vmatpush.msra.mxu0 0.0
    %1202 = vmatpush.msra.mxu0 0.0
    %1203 = vmatpush.msra.mxu0 0.0
    %1204 = vmatpush.msra.mxu0 0.0
    %1205 = vmatpush.msra.mxu0 %v1169
    %1206 = vmatpush.msra.mxu0 %v1168
    %1207 = vmatpush.msra.mxu0 %v1167
    %1208 = vmatpush.msra.mxu0 %v1166
    %1209 = vmatpush.msra.mxu0 %v1165
    %1210 = vmatpush.msra.mxu0 %v1164
    %1211 = vmatpush.msra.mxu0 %v1163
    %1212 = vmatpush.msra.mxu0 %v1162
    %1213 = vmatmul.f32.gmra.mxu0 %v1189
    %v1214 = vpop.f32.mrf.mxu0
    %v1215 = vadd.f32 0.0, %v1214
    %1216 = vmatmul.f32.gmra.mxu0 %v1191
    %v1217 = vpop.f32.mrf.mxu0
    %v1218 = vadd.f32 0.0, %v1217
    %1219 = vmatmul.f32.gmra.mxu0 %v1193
    %v1220 = vpop.f32.mrf.mxu0
    %v1221 = vadd.f32 0.0, %v1220
    %1222 = vmatmul.f32.gmra.mxu0 %v1195
    %v1223 = vpop.f32.mrf.mxu0
    %v1224 = vadd.f32 0.0, %v1223
    %1225 = vdwg.mxu0
    %v1226 = vadd.f32 %v1157, %v1215
    %v1227 = vadd.f32 %v1158, %v1218
    %v1228 = vadd.f32 %v1159, %v1221
    %v1229 = vadd.f32 %v1160, %v1224
    %v1230 = vld [vmem:[%s6] sm:$0x1]
    %v1232 = vperm.slane %v1230, 0
    %v1234 = vadd.f32 %v1226, %v1232
    %v1235 = vadd.f32 %v1227, %v1232
    %v1236 = vadd.f32 %v1228, %v1232
    %v1237 = vadd.f32 %v1229, %v1232
    %v1238 = vmax.f32 %v1234, 0.0
    %v1239 = vmax.f32 %v1235, 0.0
    %v1240 = vmax.f32 %v1236, 0.0
    %v1241 = vmax.f32 %v1237, 0.0
    %1242 = vst [vmem:[#allocation3] sm:$0xff] %v1238
    %1243 = vst [vmem:[#allocation3 + $0x8] sm:$0xff] %v1239
    %1244 = vst [vmem:[#allocation3 + $0x10] sm:$0xff] %v1240
    %1245 = vst [vmem:[#allocation3 + $0x18] sm:$0xff] %v1241
    %v1246 = vld [vmem:[#allocation3] ss:$2 sm:$0xff]
    %s1247 = scalar_lea.vmem [#allocation3], 16
    %v1248 = vld [vmem:[%s1247] ss:$2 sm:$0xff]
    %s1249 = scalar_lea.vmem [#allocation3], 1
    %v1250 = vld [vmem:[%s1249] ss:$2 sm:$0xff]
    %s1251 = scalar_lea.vmem [#allocation3], 17
    %v1252 = vld [vmem:[%s1251] ss:$2 sm:$0xff]
    %v1253 = vmax.f32 %v1246, %v1250
    %v1254 = vmax.f32 %v1248, %v1252
    %v1255 = vld [vmem:[%s7] sm:$0x1]
    %v1257 = vperm.slane %v1255, 0
    %v1259 = vmul.f32 %v1253, %v1257
    %v1260 = vmul.f32 %v1254, %v1257
    %v1261 = vld [vmem:[%s8] sm:$0x1]
    %v1263 = vperm.slane %v1261, 0
    %v1265 = vadd.f32 %v1259, %v1263
    %v1266 = vadd.f32 %v1260, %v1263
    %v1267 = vsub.f32 %v1266, %v1265
    %v1268 = vand.u32 2147483647, %v1267
    %v1270 = vrot.slane %v1268, 4
    %v1271 = vld [vmem:[#allocation7] sm:$0xff]
    %v1272 = vld [vmem:[#allocation7 + $0x8] sm:$0xff]
    %v1273 = vld [vmem:[#allocation7 + $0x10] sm:$0xff]
    %v1274 = vld [vmem:[#allocation7 + $0x18] sm:$0xff]
    %v1275 = vld [vmem:[#allocation7 + $0x20] sm:$0xff]
    %v1276 = vld [vmem:[#allocation7 + $0x28] sm:$0xff]
    %v1277 = vld [vmem:[#allocation7 + $0x30] sm:$0xff]
    %v1278 = vld [vmem:[#allocation7 + $0x38] sm:$0xff]
    %v1279 = vld [vmem:[#allocation7 + $0x40] sm:$0xff]
    %v1280 = vld [vmem:[#allocation7 + $0x48] sm:$0xff]
    %v1281 = vld [vmem:[#allocation7 + $0x50] sm:$0xff]
    %v1282 = vld [vmem:[#allocation7 + $0x58] sm:$0xff]
    %v1283 = vld [vmem:[#allocation7 + $0x60] sm:$0xff]
    %v1284 = vld [vmem:[#allocation7 + $0x68] sm:$0xff]
    %v1285 = vld [vmem:[#allocation7 + $0x70] sm:$0xff]
    %v1286 = vld [vmem:[#allocation7 + $0x78] sm:$0xff]
    %s1287 = scalar_lea.vmem [#allocation7], 128
    %v1288 = vld [vmem:[%s1287] sm:$0xff]
    %v1289 = vld [vmem:[%s1287 + $0x8] sm:$0xff]
    %v1290 = vld [vmem:[%s1287 + $0x10] sm:$0xff]
    %v1291 = vld [vmem:[%s1287 + $0x18] sm:$0xff]
    %v1292 = vld [vmem:[%s1287 + $0x20] sm:$0xff]
    %v1293 = vld [vmem:[%s1287 + $0x28] sm:$0xff]
    %v1294 = vld [vmem:[%s1287 + $0x30] sm:$0xff]
    %v1295 = vld [vmem:[%s1287 + $0x38] sm:$0xff]
    %v1296 = vld [vmem:[%s1287 + $0x40] sm:$0xff]
    %v1297 = vld [vmem:[%s1287 + $0x48] sm:$0xff]
    %v1298 = vld [vmem:[%s1287 + $0x50] sm:$0xff]
    %v1299 = vld [vmem:[%s1287 + $0x58] sm:$0xff]
    %v1300 = vld [vmem:[%s1287 + $0x60] sm:$0xff]
    %v1301 = vld [vmem:[%s1287 + $0x68] sm:$0xff]
    %v1302 = vld [vmem:[%s1287 + $0x70] sm:$0xff]
    %v1303 = vld [vmem:[%s1287 + $0x78] sm:$0xff]
    %v1304 = vperm.slane %v1268, 1
    %v1305 = vperm.slane %v1270, 1
    %vm1306 = vcmask 1041409
    %v1307 = vsel %vm1306, %v1305, %v1304
    %1309 = vmatpush.msra.mxu0 %v1303
    %1310 = vmatpush.msra.mxu0 %v1302
    %1311 = vmatpush.msra.mxu0 %v1301
    %1312 = vmatpush.msra.mxu0 %v1300
    %1313 = vmatpush.msra.mxu0 %v1299
    %1314 = vmatpush.msra.mxu0 %v1298
    %1315 = vmatpush.msra.mxu0 %v1297
    %1316 = vmatpush.msra.mxu0 %v1296
    %1317 = vmatpush.msra.mxu0 %v1295
    %1318 = vmatpush.msra.mxu0 %v1294
    %1319 = vmatpush.msra.mxu0 %v1293
    %1320 = vmatpush.msra.mxu0 %v1292
    %1321 = vmatpush.msra.mxu0 %v1291
    %1322 = vmatpush.msra.mxu0 %v1290
    %1323 = vmatpush.msra.mxu0 %v1289
    %1324 = vmatpush.msra.mxu0 %v1288
    %1325 = vmatmul.f32.gmra.mxu0 %v1307
    %v1326 = vpop.f32.mrf.mxu0
    %v1327 = vadd.f32 0.0, %v1326
    %1328 = vdwg.mxu0
    %v1329 = vperm.slane %v1268, 0
    %v1330 = vperm.slane %v1270, 0
    %v1331 = vsel %vm1306, %v1330, %v1329
    %1333 = vmatpush.msra.mxu0 %v1286
    %1334 = vmatpush.msra.mxu0 %v1285
    %1335 = vmatpush.msra.mxu0 %v1284
    %1336 = vmatpush.msra.mxu0 %v1283
    %1337 = vmatpush.msra.mxu0 %v1282
    %1338 = vmatpush.msra.mxu0 %v1281
    %1339 = vmatpush.msra.mxu0 %v1280
    %1340 = vmatpush.msra.mxu0 %v1279
    %1341 = vmatpush.msra.mxu0 %v1278
    %1342 = vmatpush.msra.mxu0 %v1277
    %1343 = vmatpush.msra.mxu0 %v1276
    %1344 = vmatpush.msra.mxu0 %v1275
    %1345 = vmatpush.msra.mxu0 %v1274
    %1346 = vmatpush.msra.mxu0 %v1273
    %1347 = vmatpush.msra.mxu0 %v1272
    %1348 = vmatpush.msra.mxu0 %v1271
    %1349 = vmatmul.f32.gmra.mxu0 %v1331
    %v1350 = vpop.f32.mrf.mxu0
    %v1351 = vadd.f32 %v1327, %v1350
    %1352 = vdwg.mxu0
    %s1353 = scalar_lea.vmem [#allocation7], 256
    %v1354 = vld [vmem:[%s1353] sm:$0xff]
    %v1355 = vld [vmem:[%s1353 + $0x8] sm:$0xff]
    %v1356 = vld [vmem:[%s1353 + $0x10] sm:$0xff]
    %v1357 = vld [vmem:[%s1353 + $0x18] sm:$0xff]
    %v1358 = vld [vmem:[%s1353 + $0x20] sm:$0xff]
    %v1359 = vld [vmem:[%s1353 + $0x28] sm:$0xff]
    %v1360 = vld [vmem:[%s1353 + $0x30] sm:$0xff]
    %v1361 = vld [vmem:[%s1353 + $0x38] sm:$0xff]
    %v1362 = vld [vmem:[%s1353 + $0x40] sm:$0xff]
    %v1363 = vld [vmem:[%s1353 + $0x48] sm:$0xff]
    %v1364 = vld [vmem:[%s1353 + $0x50] sm:$0xff]
    %v1365 = vld [vmem:[%s1353 + $0x58] sm:$0xff]
    %v1366 = vld [vmem:[%s1353 + $0x60] sm:$0xff]
    %v1367 = vld [vmem:[%s1353 + $0x68] sm:$0xff]
    %v1368 = vld [vmem:[%s1353 + $0x70] sm:$0xff]
    %v1369 = vld [vmem:[%s1353 + $0x78] sm:$0xff]
    %v1370 = vperm.slane %v1268, 2
    %v1371 = vperm.slane %v1270, 2
    %v1372 = vsel %vm1306, %v1371, %v1370
    %1374 = vmatpush.msra.mxu0 %v1369
    %1375 = vmatpush.msra.mxu0 %v1368
    %1376 = vmatpush.msra.mxu0 %v1367
    %1377 = vmatpush.msra.mxu0 %v1366
    %1378 = vmatpush.msra.mxu0 %v1365
    %1379 = vmatpush.msra.mxu0 %v1364
    %1380 = vmatpush.msra.mxu0 %v1363
    %1381 = vmatpush.msra.mxu0 %v1362
    %1382 = vmatpush.msra.mxu0 %v1361
    %1383 = vmatpush.msra.mxu0 %v1360
    %1384 = vmatpush.msra.mxu0 %v1359
    %1385 = vmatpush.msra.mxu0 %v1358
    %1386 = vmatpush.msra.mxu0 %v1357
    %1387 = vmatpush.msra.mxu0 %v1356
    %1388 = vmatpush.msra.mxu0 %v1355
    %1389 = vmatpush.msra.mxu0 %v1354
    %1390 = vmatmul.f32.gmra.mxu0 %v1372
    %v1391 = vpop.f32.mrf.mxu0
    %v1392 = vadd.f32 0.0, %v1391
    %1393 = vdwg.mxu0
    %v1394 = vadd.f32 %v1351, %v1392
    %s1395 = scalar_lea.vmem [#allocation7], 384
    %v1396 = vld [vmem:[%s1395] sm:$0xff]
    %v1397 = vld [vmem:[%s1395 + $0x8] sm:$0xff]
    %v1398 = vld [vmem:[%s1395 + $0x10] sm:$0xff]
    %v1399 = vld [vmem:[%s1395 + $0x18] sm:$0xff]
    %v1400 = vld [vmem:[%s1395 + $0x20] sm:$0xff]
    %v1401 = vld [vmem:[%s1395 + $0x28] sm:$0xff]
    %v1402 = vld [vmem:[%s1395 + $0x30] sm:$0xff]
    %v1403 = vld [vmem:[%s1395 + $0x38] sm:$0xff]
    %v1404 = vld [vmem:[%s1395 + $0x40] sm:$0xff]
    %v1405 = vld [vmem:[%s1395 + $0x48] sm:$0xff]
    %v1406 = vld [vmem:[%s1395 + $0x50] sm:$0xff]
    %v1407 = vld [vmem:[%s1395 + $0x58] sm:$0xff]
    %v1408 = vld [vmem:[%s1395 + $0x60] sm:$0xff]
    %v1409 = vld [vmem:[%s1395 + $0x68] sm:$0xff]
    %v1410 = vld [vmem:[%s1395 + $0x70] sm:$0xff]
    %v1411 = vld [vmem:[%s1395 + $0x78] sm:$0xff]
    %v1412 = vperm.slane %v1268, 3
    %v1413 = vperm.slane %v1270, 3
    %v1414 = vsel %vm1306, %v1413, %v1412
    %1416 = vmatpush.msra.mxu0 %v1411
    %1417 = vmatpush.msra.mxu0 %v1410
    %1418 = vmatpush.msra.mxu0 %v1409
    %1419 = vmatpush.msra.mxu0 %v1408
    %1420 = vmatpush.msra.mxu0 %v1407
    %1421 = vmatpush.msra.mxu0 %v1406
    %1422 = vmatpush.msra.mxu0 %v1405
    %1423 = vmatpush.msra.mxu0 %v1404
    %1424 = vmatpush.msra.mxu0 %v1403
    %1425 = vmatpush.msra.mxu0 %v1402
    %1426 = vmatpush.msra.mxu0 %v1401
    %1427 = vmatpush.msra.mxu0 %v1400
    %1428 = vmatpush.msra.mxu0 %v1399
    %1429 = vmatpush.msra.mxu0 %v1398
    %1430 = vmatpush.msra.mxu0 %v1397
    %1431 = vmatpush.msra.mxu0 %v1396
    %1432 = vmatmul.f32.gmra.mxu0 %v1414
    %v1433 = vpop.f32.mrf.mxu0
    %v1434 = vadd.f32 0.0, %v1433
    %1435 = vdwg.mxu0
    %v1436 = vadd.f32 %v1394, %v1434
    %v1437 = vld [vmem:[%s10] sm:$0x1]
    %v1439 = vperm.slane %v1437, 0
    %v1441 = vadd.f32 %v1436, %v1439
    %v1442 = vmax.f32 %v1441, 0.0
    %v1443 = vld [vmem:[%s11] sm:$0xff]
    %v1444 = vld [vmem:[%s11 + $0x8] sm:$0xff]
    %v1445 = vld [vmem:[%s11 + $0x10] sm:$0xff]
    %v1446 = vld [vmem:[%s11 + $0x18] sm:$0xff]
    %v1447 = vld [vmem:[%s11 + $0x20] sm:$0xff]
    %v1448 = vld [vmem:[%s11 + $0x28] sm:$0xff]
    %v1449 = vld [vmem:[%s11 + $0x30] sm:$0xff]
    %v1450 = vld [vmem:[%s11 + $0x38] sm:$0xff]
    %v1451 = vld [vmem:[%s11 + $0x40] sm:$0xff]
    %v1452 = vld [vmem:[%s11 + $0x48] sm:$0xff]
    %v1453 = vld [vmem:[%s11 + $0x50] sm:$0xff]
    %v1454 = vld [vmem:[%s11 + $0x58] sm:$0xff]
    %v1455 = vld [vmem:[%s11 + $0x60] sm:$0xff]
    %v1456 = vld [vmem:[%s11 + $0x68] sm:$0xff]
    %v1457 = vld [vmem:[%s11 + $0x70] sm:$0xff]
    %v1458 = vld [vmem:[%s11 + $0x78] sm:$0xff]
    %v1459 = vld [vmem:[%s12] sm:$0x1]
    %v1461 = vperm.slane %v1459, 0
    %1463 = vmatpush.msra.mxu0 %v1458
    %1464 = vmatpush.msra.mxu0 %v1457
    %1465 = vmatpush.msra.mxu0 %v1456
    %1466 = vmatpush.msra.mxu0 %v1455
    %1467 = vmatpush.msra.mxu0 %v1454
    %1468 = vmatpush.msra.mxu0 %v1453
    %1469 = vmatpush.msra.mxu0 %v1452
    %1470 = vmatpush.msra.mxu0 %v1451
    %1471 = vmatpush.msra.mxu0 %v1450
    %1472 = vmatpush.msra.mxu0 %v1449
    %1473 = vmatpush.msra.mxu0 %v1448
    %1474 = vmatpush.msra.mxu0 %v1447
    %1475 = vmatpush.msra.mxu0 %v1446
    %1476 = vmatpush.msra.mxu0 %v1445
    %1477 = vmatpush.msra.mxu0 %v1444
    %1478 = vmatpush.msra.mxu0 %v1443
    %1479 = vmatmul.f32.gmra.mxu0 %v1442
    %v1480 = vpop.f32.mrf.mxu0
    %v1481 = vadd.f32 %v1461, %v1480
    %1482 = vdwg.mxu0
    %v1483 = vmax.f32 %v1481, 0.0
    %v1484 = vld [vmem:[%s13] sm:$0xff]
    %v1485 = vld [vmem:[%s13 + $0x8] sm:$0xff]
    %v1486 = vld [vmem:[%s13 + $0x10] sm:$0xff]
    %v1487 = vld [vmem:[%s13 + $0x18] sm:$0xff]
    %v1488 = vld [vmem:[%s13 + $0x20] sm:$0xff]
    %v1489 = vld [vmem:[%s13 + $0x28] sm:$0xff]
    %v1490 = vld [vmem:[%s13 + $0x30] sm:$0xff]
    %v1491 = vld [vmem:[%s13 + $0x38] sm:$0xff]
    %v1492 = vld [vmem:[%s14] sm:$0x1]
    %v1494 = vperm.slane %v1492, 0
    %v1497 = vsel %vm728, %v1483, 0
    %1499 = vmatpush.msra.mxu0 0.0
    %1500 = vmatpush.msra.mxu0 0.0
    %1501 = vmatpush.msra.mxu0 0.0
    %1502 = vmatpush.msra.mxu0 0.0
    %1503 = vmatpush.msra.mxu0 0.0
    %1504 = vmatpush.msra.mxu0 0.0
    %1505 = vmatpush.msra.mxu0 0.0
    %1506 = vmatpush.msra.mxu0 0.0
    %1507 = vmatpush.msra.mxu0 %v1491
    %1508 = vmatpush.msra.mxu0 %v1490
    %1509 = vmatpush.msra.mxu0 %v1489
    %1510 = vmatpush.msra.mxu0 %v1488
    %1511 = vmatpush.msra.mxu0 %v1487
    %1512 = vmatpush.msra.mxu0 %v1486
    %1513 = vmatpush.msra.mxu0 %v1485
    %1514 = vmatpush.msra.mxu0 %v1484
    %1515 = vmatmul.f32.gmra.mxu0 %v1497
    %v1516 = vpop.f32.mrf.mxu0
    %v1517 = vadd.f32 %v1494, %v1516
    %1518 = vdwg.mxu0
    %v1519 = vmax.f32 %v1517, 0.0
    %v1520 = vld [vmem:[%s15] sm:$0xff]
    %v1521 = vld [vmem:[%s15 + $0x8] sm:$0xff]
    %v1522 = vld [vmem:[%s15 + $0x10] sm:$0xff]
    %v1523 = vld [vmem:[%s15 + $0x18] sm:$0xff]
    %v1524 = vld [vmem:[#allocation4] sm:$0x1]
    %v1526 = vperm.slane %v1524, 0
    %vm1528 = vcmask 261120
    %v1530 = vsel %vm1528, %v1519, 0
    %1532 = vmatpush.msra.mxu0 0.0
    %1533 = vmatpush.msra.mxu0 0.0
    %1534 = vmatpush.msra.mxu0 0.0
    %1535 = vmatpush.msra.mxu0 0.0
    %1536 = vmatpush.msra.mxu0 0.0
    %1537 = vmatpush.msra.mxu0 0.0
    %1538 = vmatpush.msra.mxu0 0.0
    %1539 = vmatpush.msra.mxu0 0.0
    %1540 = vmatpush.msra.mxu0 0.0
    %1541 = vmatpush.msra.mxu0 0.0
    %1542 = vmatpush.msra.mxu0 0.0
    %1543 = vmatpush.msra.mxu0 0.0
    %1544 = vmatpush.msra.mxu0 %v1523
    %1545 = vmatpush.msra.mxu0 %v1522
    %1546 = vmatpush.msra.mxu0 %v1521
    %1547 = vmatpush.msra.mxu0 %v1520
    %1548 = vmatmul.f32.gmra.mxu0 %v1530
    %v1549 = vpop.f32.mrf.mxu0
    %v1550 = vadd.f32 %v1526, %v1549
    %1551 = vdwg.mxu0
    %vm1552 = vcmask 1024
    %1553 = vst.msk [vmem:[%s17] sm:$0x3] %vm1552, %v1550
    // Predicated region
    $region78: #{tpu_custom_call.1} parent=1 // pred_check
      _
    $region79: #{tpu_custom_call.1} parent=1 // pred_check_branch
      %1555 = sbr.rel (0) target = $region81
    $region80: #{tpu_custom_call.1} parent=1 // pred_region
      _
    $region81: #{tpu_custom_call.1} parent=1 // pred_fallthru
      _
    // Predicated region
    $region82: #{tpu_custom_call.1} parent=1 // pred_check
      _
    $region83: #{tpu_custom_call.1} parent=1 // pred_check_branch
      %1557 = sbr.rel (0) target = $region85
    $region84: #{tpu_custom_call.1} parent=1 // pred_region
      _
    $region85: #{tpu_custom_call.1} parent=1 // pred_fallthru
      _
    %1558 = vsyncpa [#allocation6], 1
    %1559 = vsyncpa [#allocation8], 1

</llo_original>
